<compile_context>
chip_gen: v7x
topology: tpu7x:2x2x1
jax: 0.10.0
libtpu: 0.0.40
codegen_flags: <defaults>
</compile_context>

<pallas_src>
import functools

import jax
import jax.numpy as jnp
from jax.experimental import pallas as pl
from jax.experimental.pallas import tpu as pltpu

_BN_EPS = 1e-5
_VMEM = pl.BlockSpec(memory_space=pltpu.MemorySpace.VMEM)


def _round_up(x, m):
    return ((x + m - 1) // m) * m


# ----------------------------------------------------------------------------
# Fused kernel builder (layer counts / dims are trace-time constants)
# ----------------------------------------------------------------------------
def _make_vae_kernel(n_enc, n_dec, latent_dim, half):
    def _dot(a, w):
        # Cast the activation to the weight dtype (bf16 for v6e/v7x production
        # runs, f32 here); always accumulate in f32 on the MXU.
        return jnp.dot(a.astype(w.dtype), w, preferred_element_type=jnp.float32)

    def _bn_relu(y, gamma, beta):
        # Training-mode BatchNorm1d: batch mean, biased variance, eps=1e-5.
        mean = jnp.mean(y, axis=0, keepdims=True)
        yc = y - mean                                  # reused below
        var = jnp.mean(yc * yc, axis=0, keepdims=True)
        y_hat = yc * jax.lax.rsqrt(var + _BN_EPS)
        return jnp.maximum(y_hat * gamma + beta, 0.0)

    def kernel(*refs):
        it = iter(refs)
        x_ref, eps_ref = next(it), next(it)
        enc = [(next(it), next(it), next(it)) for _ in range(n_enc)]
        w_mv_ref, b_mv_ref = next(it), next(it)
        dec = [(next(it), next(it), next(it)) for _ in range(n_dec)]
        w_fin_ref, b_fin_ref = next(it), next(it)
        recon_ref, mv_ref = next(it), next(it)

        # ---- encoder: (Linear -> BN -> ReLU) x n_enc, all VMEM-resident ----
        h = x_ref[...]
        for w, g, b in enc:
            h = _bn_relu(_dot(h, w[...]), g[...], b[...])

        # ---- fc_mu / fc_var as a single lane-dense matmul + reparameterize ----
        mv = _dot(h, w_mv_ref[...]) + b_mv_ref[...]            # [B, 2*half]
        mu = mv[:, :latent_dim]
        logvar = mv[:, half:half + latent_dim]
        z = mu + eps_ref[...] * jnp.exp(0.5 * logvar)          # [B, latent]

        # ---- decoder: (Linear -> BN -> ReLU) x n_dec ----
        d = z
        for w, g, b in dec:
            d = _bn_relu(_dot(d, w[...]), g[...], b[...])

        # ---- lane-dense (128-padded) stores ----
        recon_ref[...] = _dot(d, w_fin_ref[...]) + b_fin_ref[...]
        mv_ref[...] = mv

    return kernel


# ----------------------------------------------------------------------------
# Parameter setup (deterministic, PyTorch-default-style init)
# ----------------------------------------------------------------------------
def _init_linear(key, in_dim, out_dim):
    """nn.Linear default init: U(-1/sqrt(in), 1/sqrt(in)) for W and b."""
    kw, kb = jax.random.split(key)
    bound = 1.0 / jnp.sqrt(jnp.float32(in_dim))
    # PyTorch stores W as [out, in]; pre-transpose to [in, out] for x @ W.
    w = jax.random.uniform(kw, (out_dim, in_dim), jnp.float32, -bound, bound).T
    b = jax.random.uniform(kb, (1, out_dim), jnp.float32, -bound, bound)
    return w, b


def init_vae_params(key, input_dim, latent_dim, hidden_dims):
    params = {"encoder": [], "decoder": []}
    keys = jax.random.split(key, 2 * len(hidden_dims) + 3)
    ki = 0

    in_dim = input_dim
    for h in hidden_dims:
        w, b = _init_linear(keys[ki], in_dim, h); ki += 1
        params["encoder"].append((w, b, jnp.ones((1, h), jnp.float32),
                                  jnp.zeros((1, h), jnp.float32)))
        in_dim = h

    params["fc_mu"] = _init_linear(keys[ki], hidden_dims[-1], latent_dim); ki += 1
    params["fc_var"] = _init_linear(keys[ki], hidden_dims[-1], latent_dim); ki += 1

    dec_dims = list(reversed(hidden_dims))        # matches hidden_dims.reverse()
    in_dim = latent_dim
    for h in dec_dims:
        w, b = _init_linear(keys[ki], in_dim, h); ki += 1
        params["decoder"].append((w, b, jnp.ones((1, h), jnp.float32),
                                  jnp.zeros((1, h), jnp.float32)))
        in_dim = h
    params["final"] = _init_linear(keys[ki], dec_dims[-1], input_dim)
    return params


def pack_vae_params(params, *, input_dim, latent_dim, matmul_dtype=jnp.float32):
    """Flatten + pad params for the fused kernel (done once, host-side)."""
    half = max(64, latent_dim)          # mu -> lanes [0:L), logvar -> [half:half+L)
    out_pad = _round_up(input_dim, 128)  # lane-dense recon output width

    flat = []
    # Hidden layers: bias dropped — exactly cancelled by train-mode BN mean.
    for w, _b, g, bt in params["encoder"]:
        flat += [w.astype(matmul_dtype), g, bt]

    w_mu, b_mu = params["fc_mu"]
    w_var, b_var = params["fc_var"]
    dh = w_mu.shape[0]
    w_mv = (jnp.zeros((dh, 2 * half), jnp.float32)
            .at[:, :latent_dim].set(w_mu)
            .at[:, half:half + latent_dim].set(w_var))
    b_mv = (jnp.zeros((1, 2 * half), jnp.float32)
            .at[:, :latent_dim].set(b_mu)
            .at[:, half:half + latent_dim].set(b_var))
    flat += [w_mv.astype(matmul_dtype), b_mv]

    for w, _b, g, bt in params["decoder"]:
        flat += [w.astype(matmul_dtype), g, bt]

    w_fin, b_fin = params["final"]
    w_fp = jnp.zeros((w_fin.shape[0], out_pad), jnp.float32).at[:, :input_dim].set(w_fin)
    b_fp = jnp.zeros((1, out_pad), jnp.float32).at[:, :input_dim].set(b_fin)
    flat += [w_fp.astype(matmul_dtype), b_fp]

    meta = dict(n_enc=len(params["encoder"]), n_dec=len(params["decoder"]),
                latent_dim=latent_dim, half=half, out_pad=out_pad,
                input_dim=input_dim)
    return {"flat": flat, "meta": meta}


# ----------------------------------------------------------------------------
# Forward: ONE pallas_call for the whole VAE -> (recon, mu, logvar)
# ----------------------------------------------------------------------------
def vae_forward(packed, x, eps):
    meta = packed["meta"]
    flat = packed["flat"]
    B = x.shape[0]
    half = meta["half"]

    kernel = _make_vae_kernel(meta["n_enc"], meta["n_dec"],
                              meta["latent_dim"], half)
    recon_pad, mv_pad = pl.pallas_call(
        kernel,
        out_shape=(jax.ShapeDtypeStruct((B, meta["out_pad"]), jnp.float32),
                   jax.ShapeDtypeStruct((B, 2 * half), jnp.float32)),
        in_specs=[_VMEM] * (2 + len(flat)),
        out_specs=(_VMEM, _VMEM),
    )(x, eps, *flat)

    recon = recon_pad[:, :meta["input_dim"]]
    mu = mv_pad[:, :meta["latent_dim"]]
    logvar = mv_pad[:, half:half + meta["latent_dim"]]
    return recon, mu, logvar


if __name__ == "__main__":
    # Small, module-consistent shapes.
    batch = 8
    input_dim = 32
    latent_dim = 2
    hidden_dims = [64, 32, 16]   # scaled-down analogue of the default [512, 256, 128]

    key = jax.random.PRNGKey(0)
    k_params, k_x, k_eps = jax.random.split(key, 3)

    params = init_vae_params(k_params, input_dim, latent_dim, hidden_dims)
    # matmul_dtype=jnp.bfloat16 is the right lever at production dims
    # ([512,256,128], large batch) on v6e/v7x; keep f32 at toy sizes.
    packed = pack_vae_params(params, input_dim=input_dim, latent_dim=latent_dim,
                             matmul_dtype=jnp.float32)

    x = jax.random.normal(k_x, (batch, input_dim), jnp.float32)
    # eps plays the role of torch.randn_like(std) in reparameterize()
    eps = jax.random.normal(k_eps, (batch, latent_dim), jnp.float32)

    fwd = jax.jit(functools.partial(vae_forward, packed))
    recon, mu, logvar = fwd(x, eps)
    jax.block_until_ready((recon, mu, logvar))

    assert recon.shape == (batch, input_dim)
    assert mu.shape == (batch, latent_dim)
    assert logvar.shape == (batch, latent_dim)
    assert bool(jnp.all(jnp.isfinite(recon)))
    assert bool(jnp.all(jnp.isfinite(mu)))
    assert bool(jnp.all(jnp.isfinite(logvar)))
    print("KERNEL_OK")
</pallas_src>

<mosaic_0001>
module attributes {stable_mosaic.version = 11 : i64} {
  func.func @kernel(%arg0: memref<8x32xf32, #tpu.memory_space<vmem>>, %arg1: memref<8x2xf32, #tpu.memory_space<vmem>>, %arg2: memref<32x64xf32, #tpu.memory_space<vmem>>, %arg3: memref<1x64xf32, #tpu.memory_space<vmem>>, %arg4: memref<1x64xf32, #tpu.memory_space<vmem>>, %arg5: memref<64x32xf32, #tpu.memory_space<vmem>>, %arg6: memref<1x32xf32, #tpu.memory_space<vmem>>, %arg7: memref<1x32xf32, #tpu.memory_space<vmem>>, %arg8: memref<32x16xf32, #tpu.memory_space<vmem>>, %arg9: memref<1x16xf32, #tpu.memory_space<vmem>>, %arg10: memref<1x16xf32, #tpu.memory_space<vmem>>, %arg11: memref<16x128xf32, #tpu.memory_space<vmem>>, %arg12: memref<1x128xf32, #tpu.memory_space<vmem>>, %arg13: memref<2x16xf32, #tpu.memory_space<vmem>>, %arg14: memref<1x16xf32, #tpu.memory_space<vmem>>, %arg15: memref<1x16xf32, #tpu.memory_space<vmem>>, %arg16: memref<16x32xf32, #tpu.memory_space<vmem>>, %arg17: memref<1x32xf32, #tpu.memory_space<vmem>>, %arg18: memref<1x32xf32, #tpu.memory_space<vmem>>, %arg19: memref<32x64xf32, #tpu.memory_space<vmem>>, %arg20: memref<1x64xf32, #tpu.memory_space<vmem>>, %arg21: memref<1x64xf32, #tpu.memory_space<vmem>>, %arg22: memref<64x128xf32, #tpu.memory_space<vmem>>, %arg23: memref<1x128xf32, #tpu.memory_space<vmem>>, %arg24: memref<8x128xf32, #tpu.memory_space<vmem>>, %arg25: memref<8x128xf32, #tpu.memory_space<vmem>>) attributes {dimension_semantics = [], scalar_prefetch = 0 : i64, scratch_operands = 0 : i64, tpu.core_type = #tpu.core_type<tc>} {
    %c0 = arith.constant 0 : index
    %c0_0 = arith.constant 0 : index
    %0 = vector.load %arg0[%c0, %c0_0] : memref<8x32xf32, #tpu.memory_space<vmem>>, vector<8x32xf32>
    %c0_1 = arith.constant 0 : index
    %c0_2 = arith.constant 0 : index
    %1 = vector.load %arg2[%c0_1, %c0_2] : memref<32x64xf32, #tpu.memory_space<vmem>>, vector<32x64xf32>
    %cst = arith.constant dense<0.000000e+00> : vector<8x64xf32>
    %2 = tpu.matmul %0, %1, %cst {dimension_numbers = #tpu.dot_dimension_numbers<[1], [0], [0], [1], [0, 0, 1, 1], [], []>} : vector<8x32xf32>, vector<32x64xf32>, vector<8x64xf32> -> vector<8x64xf32>
    %c0_3 = arith.constant 0 : index
    %c0_4 = arith.constant 0 : index
    %3 = vector.load %arg3[%c0_3, %c0_4] : memref<1x64xf32, #tpu.memory_space<vmem>>, vector<1x64xf32>
    %c0_5 = arith.constant 0 : index
    %c0_6 = arith.constant 0 : index
    %4 = vector.load %arg4[%c0_5, %c0_6] : memref<1x64xf32, #tpu.memory_space<vmem>>, vector<1x64xf32>
    %cst_7 = arith.constant dense<0.000000e+00> : vector<64xf32>
    %5 = vector.multi_reduction <add>, %2, %cst_7 [0] : vector<8x64xf32> to vector<64xf32>
    %6 = vector.shape_cast %5 : vector<64xf32> to vector<1x64xf32>
    %cst_8 = arith.constant 8.000000e+00 : f32
    %7 = vector.broadcast %cst_8 : f32 to vector<1x64xf32>
    %8 = arith.divf %6, %7 : vector<1x64xf32>
    %9 = vector.broadcast %8 : vector<1x64xf32> to vector<8x64xf32>
    %10 = arith.subf %2, %9 : vector<8x64xf32>
    %11 = arith.mulf %10, %10 : vector<8x64xf32>
    %cst_9 = arith.constant dense<0.000000e+00> : vector<64xf32>
    %12 = vector.multi_reduction <add>, %11, %cst_9 [0] : vector<8x64xf32> to vector<64xf32>
    %13 = vector.shape_cast %12 : vector<64xf32> to vector<1x64xf32>
    %cst_10 = arith.constant 8.000000e+00 : f32
    %14 = vector.broadcast %cst_10 : f32 to vector<1x64xf32>
    %15 = arith.divf %13, %14 : vector<1x64xf32>
    %cst_11 = arith.constant 9.99999974E-6 : f32
    %16 = vector.broadcast %cst_11 : f32 to vector<1x64xf32>
    %17 = arith.addf %15, %16 : vector<1x64xf32>
    %18 = math.rsqrt %17 : vector<1x64xf32>
    %19 = vector.broadcast %18 : vector<1x64xf32> to vector<8x64xf32>
    %20 = arith.mulf %10, %19 : vector<8x64xf32>
    %21 = vector.broadcast %3 : vector<1x64xf32> to vector<8x64xf32>
    %22 = arith.mulf %20, %21 : vector<8x64xf32>
    %23 = vector.broadcast %4 : vector<1x64xf32> to vector<8x64xf32>
    %24 = arith.addf %22, %23 : vector<8x64xf32>
    %cst_12 = arith.constant 0.000000e+00 : f32
    %25 = vector.broadcast %cst_12 : f32 to vector<8x64xf32>
    %26 = arith.maximumf %24, %25 : vector<8x64xf32>
    %c0_13 = arith.constant 0 : index
    %c0_14 = arith.constant 0 : index
    %27 = vector.load %arg5[%c0_13, %c0_14] : memref<64x32xf32, #tpu.memory_space<vmem>>, vector<64x32xf32>
    %cst_15 = arith.constant dense<0.000000e+00> : vector<8x32xf32>
    %28 = tpu.matmul %26, %27, %cst_15 {dimension_numbers = #tpu.dot_dimension_numbers<[1], [0], [0], [1], [0, 0, 1, 1], [], []>} : vector<8x64xf32>, vector<64x32xf32>, vector<8x32xf32> -> vector<8x32xf32>
    %c0_16 = arith.constant 0 : index
    %c0_17 = arith.constant 0 : index
    %29 = vector.load %arg6[%c0_16, %c0_17] : memref<1x32xf32, #tpu.memory_space<vmem>>, vector<1x32xf32>
    %c0_18 = arith.constant 0 : index
    %c0_19 = arith.constant 0 : index
    %30 = vector.load %arg7[%c0_18, %c0_19] : memref<1x32xf32, #tpu.memory_space<vmem>>, vector<1x32xf32>
    %cst_20 = arith.constant dense<0.000000e+00> : vector<32xf32>
    %31 = vector.multi_reduction <add>, %28, %cst_20 [0] : vector<8x32xf32> to vector<32xf32>
    %32 = vector.shape_cast %31 : vector<32xf32> to vector<1x32xf32>
    %cst_21 = arith.constant 8.000000e+00 : f32
    %33 = vector.broadcast %cst_21 : f32 to vector<1x32xf32>
    %34 = arith.divf %32, %33 : vector<1x32xf32>
    %35 = vector.broadcast %34 : vector<1x32xf32> to vector<8x32xf32>
    %36 = arith.subf %28, %35 : vector<8x32xf32>
    %37 = arith.mulf %36, %36 : vector<8x32xf32>
    %cst_22 = arith.constant dense<0.000000e+00> : vector<32xf32>
    %38 = vector.multi_reduction <add>, %37, %cst_22 [0] : vector<8x32xf32> to vector<32xf32>
    %39 = vector.shape_cast %38 : vector<32xf32> to vector<1x32xf32>
    %cst_23 = arith.constant 8.000000e+00 : f32
    %40 = vector.broadcast %cst_23 : f32 to vector<1x32xf32>
    %41 = arith.divf %39, %40 : vector<1x32xf32>
    %cst_24 = arith.constant 9.99999974E-6 : f32
    %42 = vector.broadcast %cst_24 : f32 to vector<1x32xf32>
    %43 = arith.addf %41, %42 : vector<1x32xf32>
    %44 = math.rsqrt %43 : vector<1x32xf32>
    %45 = vector.broadcast %44 : vector<1x32xf32> to vector<8x32xf32>
    %46 = arith.mulf %36, %45 : vector<8x32xf32>
    %47 = vector.broadcast %29 : vector<1x32xf32> to vector<8x32xf32>
    %48 = arith.mulf %46, %47 : vector<8x32xf32>
    %49 = vector.broadcast %30 : vector<1x32xf32> to vector<8x32xf32>
    %50 = arith.addf %48, %49 : vector<8x32xf32>
    %cst_25 = arith.constant 0.000000e+00 : f32
    %51 = vector.broadcast %cst_25 : f32 to vector<8x32xf32>
    %52 = arith.maximumf %50, %51 : vector<8x32xf32>
    %c0_26 = arith.constant 0 : index
    %c0_27 = arith.constant 0 : index
    %53 = vector.load %arg8[%c0_26, %c0_27] : memref<32x16xf32, #tpu.memory_space<vmem>>, vector<32x16xf32>
    %cst_28 = arith.constant dense<0.000000e+00> : vector<8x16xf32>
    %54 = tpu.matmul %52, %53, %cst_28 {dimension_numbers = #tpu.dot_dimension_numbers<[1], [0], [0], [1], [0, 0, 1, 1], [], []>} : vector<8x32xf32>, vector<32x16xf32>, vector<8x16xf32> -> vector<8x16xf32>
    %c0_29 = arith.constant 0 : index
    %c0_30 = arith.constant 0 : index
    %55 = vector.load %arg9[%c0_29, %c0_30] : memref<1x16xf32, #tpu.memory_space<vmem>>, vector<1x16xf32>
    %c0_31 = arith.constant 0 : index
    %c0_32 = arith.constant 0 : index
    %56 = vector.load %arg10[%c0_31, %c0_32] : memref<1x16xf32, #tpu.memory_space<vmem>>, vector<1x16xf32>
    %cst_33 = arith.constant dense<0.000000e+00> : vector<16xf32>
    %57 = vector.multi_reduction <add>, %54, %cst_33 [0] : vector<8x16xf32> to vector<16xf32>
    %58 = vector.shape_cast %57 : vector<16xf32> to vector<1x16xf32>
    %cst_34 = arith.constant 8.000000e+00 : f32
    %59 = vector.broadcast %cst_34 : f32 to vector<1x16xf32>
    %60 = arith.divf %58, %59 : vector<1x16xf32>
    %61 = vector.broadcast %60 : vector<1x16xf32> to vector<8x16xf32>
    %62 = arith.subf %54, %61 : vector<8x16xf32>
    %63 = arith.mulf %62, %62 : vector<8x16xf32>
    %cst_35 = arith.constant dense<0.000000e+00> : vector<16xf32>
    %64 = vector.multi_reduction <add>, %63, %cst_35 [0] : vector<8x16xf32> to vector<16xf32>
    %65 = vector.shape_cast %64 : vector<16xf32> to vector<1x16xf32>
    %cst_36 = arith.constant 8.000000e+00 : f32
    %66 = vector.broadcast %cst_36 : f32 to vector<1x16xf32>
    %67 = arith.divf %65, %66 : vector<1x16xf32>
    %cst_37 = arith.constant 9.99999974E-6 : f32
    %68 = vector.broadcast %cst_37 : f32 to vector<1x16xf32>
    %69 = arith.addf %67, %68 : vector<1x16xf32>
    %70 = math.rsqrt %69 : vector<1x16xf32>
    %71 = vector.broadcast %70 : vector<1x16xf32> to vector<8x16xf32>
    %72 = arith.mulf %62, %71 : vector<8x16xf32>
    %73 = vector.broadcast %55 : vector<1x16xf32> to vector<8x16xf32>
    %74 = arith.mulf %72, %73 : vector<8x16xf32>
    %75 = vector.broadcast %56 : vector<1x16xf32> to vector<8x16xf32>
    %76 = arith.addf %74, %75 : vector<8x16xf32>
    %cst_38 = arith.constant 0.000000e+00 : f32
    %77 = vector.broadcast %cst_38 : f32 to vector<8x16xf32>
    %78 = arith.maximumf %76, %77 : vector<8x16xf32>
    %c0_39 = arith.constant 0 : index
    %c0_40 = arith.constant 0 : index
    %79 = vector.load %arg11[%c0_39, %c0_40] : memref<16x128xf32, #tpu.memory_space<vmem>>, vector<16x128xf32>
    %cst_41 = arith.constant dense<0.000000e+00> : vector<8x128xf32>
    %80 = tpu.matmul %78, %79, %cst_41 {dimension_numbers = #tpu.dot_dimension_numbers<[1], [0], [0], [1], [0, 0, 1, 1], [], []>} : vector<8x16xf32>, vector<16x128xf32>, vector<8x128xf32> -> vector<8x128xf32>
    %c0_42 = arith.constant 0 : index
    %c0_43 = arith.constant 0 : index
    %81 = vector.load %arg12[%c0_42, %c0_43] : memref<1x128xf32, #tpu.memory_space<vmem>>, vector<1x128xf32>
    %82 = vector.broadcast %81 : vector<1x128xf32> to vector<8x128xf32>
    %83 = arith.addf %80, %82 : vector<8x128xf32>
    %84 = vector.extract_strided_slice %83 {offsets = [0, 0], sizes = [8, 2], strides = [1, 1]} : vector<8x128xf32> to vector<8x2xf32>
    %85 = vector.extract_strided_slice %83 {offsets = [0, 64], sizes = [8, 2], strides = [1, 1]} : vector<8x128xf32> to vector<8x2xf32>
    %c0_44 = arith.constant 0 : index
    %c0_45 = arith.constant 0 : index
    %86 = vector.load %arg1[%c0_44, %c0_45] : memref<8x2xf32, #tpu.memory_space<vmem>>, vector<8x2xf32>
    %cst_46 = arith.constant 5.000000e-01 : f32
    %87 = vector.broadcast %cst_46 : f32 to vector<8x2xf32>
    %88 = arith.mulf %87, %85 : vector<8x2xf32>
    %89 = math.exp %88 : vector<8x2xf32>
    %90 = arith.mulf %86, %89 : vector<8x2xf32>
    %91 = arith.addf %84, %90 : vector<8x2xf32>
    %c0_47 = arith.constant 0 : index
    %c0_48 = arith.constant 0 : index
    %92 = vector.load %arg13[%c0_47, %c0_48] : memref<2x16xf32, #tpu.memory_space<vmem>>, vector<2x16xf32>
    %cst_49 = arith.constant dense<0.000000e+00> : vector<8x16xf32>
    %93 = tpu.matmul %91, %92, %cst_49 {dimension_numbers = #tpu.dot_dimension_numbers<[1], [0], [0], [1], [0, 0, 1, 1], [], []>} : vector<8x2xf32>, vector<2x16xf32>, vector<8x16xf32> -> vector<8x16xf32>
    %c0_50 = arith.constant 0 : index
    %c0_51 = arith.constant 0 : index
    %94 = vector.load %arg14[%c0_50, %c0_51] : memref<1x16xf32, #tpu.memory_space<vmem>>, vector<1x16xf32>
    %c0_52 = arith.constant 0 : index
    %c0_53 = arith.constant 0 : index
    %95 = vector.load %arg15[%c0_52, %c0_53] : memref<1x16xf32, #tpu.memory_space<vmem>>, vector<1x16xf32>
    %cst_54 = arith.constant dense<0.000000e+00> : vector<16xf32>
    %96 = vector.multi_reduction <add>, %93, %cst_54 [0] : vector<8x16xf32> to vector<16xf32>
    %97 = vector.shape_cast %96 : vector<16xf32> to vector<1x16xf32>
    %cst_55 = arith.constant 8.000000e+00 : f32
    %98 = vector.broadcast %cst_55 : f32 to vector<1x16xf32>
    %99 = arith.divf %97, %98 : vector<1x16xf32>
    %100 = vector.broadcast %99 : vector<1x16xf32> to vector<8x16xf32>
    %101 = arith.subf %93, %100 : vector<8x16xf32>
    %102 = arith.mulf %101, %101 : vector<8x16xf32>
    %cst_56 = arith.constant dense<0.000000e+00> : vector<16xf32>
    %103 = vector.multi_reduction <add>, %102, %cst_56 [0] : vector<8x16xf32> to vector<16xf32>
    %104 = vector.shape_cast %103 : vector<16xf32> to vector<1x16xf32>
    %cst_57 = arith.constant 8.000000e+00 : f32
    %105 = vector.broadcast %cst_57 : f32 to vector<1x16xf32>
    %106 = arith.divf %104, %105 : vector<1x16xf32>
    %cst_58 = arith.constant 9.99999974E-6 : f32
    %107 = vector.broadcast %cst_58 : f32 to vector<1x16xf32>
    %108 = arith.addf %106, %107 : vector<1x16xf32>
    %109 = math.rsqrt %108 : vector<1x16xf32>
    %110 = vector.broadcast %109 : vector<1x16xf32> to vector<8x16xf32>
    %111 = arith.mulf %101, %110 : vector<8x16xf32>
    %112 = vector.broadcast %94 : vector<1x16xf32> to vector<8x16xf32>
    %113 = arith.mulf %111, %112 : vector<8x16xf32>
    %114 = vector.broadcast %95 : vector<1x16xf32> to vector<8x16xf32>
    %115 = arith.addf %113, %114 : vector<8x16xf32>
    %cst_59 = arith.constant 0.000000e+00 : f32
    %116 = vector.broadcast %cst_59 : f32 to vector<8x16xf32>
    %117 = arith.maximumf %115, %116 : vector<8x16xf32>
    %c0_60 = arith.constant 0 : index
    %c0_61 = arith.constant 0 : index
    %118 = vector.load %arg16[%c0_60, %c0_61] : memref<16x32xf32, #tpu.memory_space<vmem>>, vector<16x32xf32>
    %cst_62 = arith.constant dense<0.000000e+00> : vector<8x32xf32>
    %119 = tpu.matmul %117, %118, %cst_62 {dimension_numbers = #tpu.dot_dimension_numbers<[1], [0], [0], [1], [0, 0, 1, 1], [], []>} : vector<8x16xf32>, vector<16x32xf32>, vector<8x32xf32> -> vector<8x32xf32>
    %c0_63 = arith.constant 0 : index
    %c0_64 = arith.constant 0 : index
    %120 = vector.load %arg17[%c0_63, %c0_64] : memref<1x32xf32, #tpu.memory_space<vmem>>, vector<1x32xf32>
    %c0_65 = arith.constant 0 : index
    %c0_66 = arith.constant 0 : index
    %121 = vector.load %arg18[%c0_65, %c0_66] : memref<1x32xf32, #tpu.memory_space<vmem>>, vector<1x32xf32>
    %cst_67 = arith.constant dense<0.000000e+00> : vector<32xf32>
    %122 = vector.multi_reduction <add>, %119, %cst_67 [0] : vector<8x32xf32> to vector<32xf32>
    %123 = vector.shape_cast %122 : vector<32xf32> to vector<1x32xf32>
    %cst_68 = arith.constant 8.000000e+00 : f32
    %124 = vector.broadcast %cst_68 : f32 to vector<1x32xf32>
    %125 = arith.divf %123, %124 : vector<1x32xf32>
    %126 = vector.broadcast %125 : vector<1x32xf32> to vector<8x32xf32>
    %127 = arith.subf %119, %126 : vector<8x32xf32>
    %128 = arith.mulf %127, %127 : vector<8x32xf32>
    %cst_69 = arith.constant dense<0.000000e+00> : vector<32xf32>
    %129 = vector.multi_reduction <add>, %128, %cst_69 [0] : vector<8x32xf32> to vector<32xf32>
    %130 = vector.shape_cast %129 : vector<32xf32> to vector<1x32xf32>
    %cst_70 = arith.constant 8.000000e+00 : f32
    %131 = vector.broadcast %cst_70 : f32 to vector<1x32xf32>
    %132 = arith.divf %130, %131 : vector<1x32xf32>
    %cst_71 = arith.constant 9.99999974E-6 : f32
    %133 = vector.broadcast %cst_71 : f32 to vector<1x32xf32>
    %134 = arith.addf %132, %133 : vector<1x32xf32>
    %135 = math.rsqrt %134 : vector<1x32xf32>
    %136 = vector.broadcast %135 : vector<1x32xf32> to vector<8x32xf32>
    %137 = arith.mulf %127, %136 : vector<8x32xf32>
    %138 = vector.broadcast %120 : vector<1x32xf32> to vector<8x32xf32>
    %139 = arith.mulf %137, %138 : vector<8x32xf32>
    %140 = vector.broadcast %121 : vector<1x32xf32> to vector<8x32xf32>
    %141 = arith.addf %139, %140 : vector<8x32xf32>
    %cst_72 = arith.constant 0.000000e+00 : f32
    %142 = vector.broadcast %cst_72 : f32 to vector<8x32xf32>
    %143 = arith.maximumf %141, %142 : vector<8x32xf32>
    %c0_73 = arith.constant 0 : index
    %c0_74 = arith.constant 0 : index
    %144 = vector.load %arg19[%c0_73, %c0_74] : memref<32x64xf32, #tpu.memory_space<vmem>>, vector<32x64xf32>
    %cst_75 = arith.constant dense<0.000000e+00> : vector<8x64xf32>
    %145 = tpu.matmul %143, %144, %cst_75 {dimension_numbers = #tpu.dot_dimension_numbers<[1], [0], [0], [1], [0, 0, 1, 1], [], []>} : vector<8x32xf32>, vector<32x64xf32>, vector<8x64xf32> -> vector<8x64xf32>
    %c0_76 = arith.constant 0 : index
    %c0_77 = arith.constant 0 : index
    %146 = vector.load %arg20[%c0_76, %c0_77] : memref<1x64xf32, #tpu.memory_space<vmem>>, vector<1x64xf32>
    %c0_78 = arith.constant 0 : index
    %c0_79 = arith.constant 0 : index
    %147 = vector.load %arg21[%c0_78, %c0_79] : memref<1x64xf32, #tpu.memory_space<vmem>>, vector<1x64xf32>
    %cst_80 = arith.constant dense<0.000000e+00> : vector<64xf32>
    %148 = vector.multi_reduction <add>, %145, %cst_80 [0] : vector<8x64xf32> to vector<64xf32>
    %149 = vector.shape_cast %148 : vector<64xf32> to vector<1x64xf32>
    %cst_81 = arith.constant 8.000000e+00 : f32
    %150 = vector.broadcast %cst_81 : f32 to vector<1x64xf32>
    %151 = arith.divf %149, %150 : vector<1x64xf32>
    %152 = vector.broadcast %151 : vector<1x64xf32> to vector<8x64xf32>
    %153 = arith.subf %145, %152 : vector<8x64xf32>
    %154 = arith.mulf %153, %153 : vector<8x64xf32>
    %cst_82 = arith.constant dense<0.000000e+00> : vector<64xf32>
    %155 = vector.multi_reduction <add>, %154, %cst_82 [0] : vector<8x64xf32> to vector<64xf32>
    %156 = vector.shape_cast %155 : vector<64xf32> to vector<1x64xf32>
    %cst_83 = arith.constant 8.000000e+00 : f32
    %157 = vector.broadcast %cst_83 : f32 to vector<1x64xf32>
    %158 = arith.divf %156, %157 : vector<1x64xf32>
    %cst_84 = arith.constant 9.99999974E-6 : f32
    %159 = vector.broadcast %cst_84 : f32 to vector<1x64xf32>
    %160 = arith.addf %158, %159 : vector<1x64xf32>
    %161 = math.rsqrt %160 : vector<1x64xf32>
    %162 = vector.broadcast %161 : vector<1x64xf32> to vector<8x64xf32>
    %163 = arith.mulf %153, %162 : vector<8x64xf32>
    %164 = vector.broadcast %146 : vector<1x64xf32> to vector<8x64xf32>
    %165 = arith.mulf %163, %164 : vector<8x64xf32>
    %166 = vector.broadcast %147 : vector<1x64xf32> to vector<8x64xf32>
    %167 = arith.addf %165, %166 : vector<8x64xf32>
    %cst_85 = arith.constant 0.000000e+00 : f32
    %168 = vector.broadcast %cst_85 : f32 to vector<8x64xf32>
    %169 = arith.maximumf %167, %168 : vector<8x64xf32>
    %c0_86 = arith.constant 0 : index
    %c0_87 = arith.constant 0 : index
    %170 = vector.load %arg22[%c0_86, %c0_87] : memref<64x128xf32, #tpu.memory_space<vmem>>, vector<64x128xf32>
    %cst_88 = arith.constant dense<0.000000e+00> : vector<8x128xf32>
    %171 = tpu.matmul %169, %170, %cst_88 {dimension_numbers = #tpu.dot_dimension_numbers<[1], [0], [0], [1], [0, 0, 1, 1], [], []>} : vector<8x64xf32>, vector<64x128xf32>, vector<8x128xf32> -> vector<8x128xf32>
    %c0_89 = arith.constant 0 : index
    %c0_90 = arith.constant 0 : index
    %172 = vector.load %arg23[%c0_89, %c0_90] : memref<1x128xf32, #tpu.memory_space<vmem>>, vector<1x128xf32>
    %173 = vector.broadcast %172 : vector<1x128xf32> to vector<8x128xf32>
    %174 = arith.addf %171, %173 : vector<8x128xf32>
    %c0_91 = arith.constant 0 : index
    %c0_92 = arith.constant 0 : index
    %175 = vector.load %arg24[%c0_91, %c0_92] : memref<8x128xf32, #tpu.memory_space<vmem>>, vector<8x128xf32>
    tpu.vector_store %arg24[%c0_91, %c0_92], %174 {strides = array<i32>} : memref<8x128xf32, #tpu.memory_space<vmem>>, vector<8x128xf32>,
    %c0_93 = arith.constant 0 : index
    %c0_94 = arith.constant 0 : index
    %176 = vector.load %arg25[%c0_93, %c0_94] : memref<8x128xf32, #tpu.memory_space<vmem>>, vector<8x128xf32>
    tpu.vector_store %arg25[%c0_93, %c0_94], %83 {strides = array<i32>} : memref<8x128xf32, #tpu.memory_space<vmem>>, vector<8x128xf32>,
    return
  }
}

</mosaic_0001>

<llo_original>
// kernel: vae_forward.1
$region0: #{vae_forward.1}
  #allocation0 [shape = 'u32[]', space=smem, size = 0x4, offset = 0x4, fixed_abs, tag = 'smem constant byte address 0x4 - core index']
  #allocation1 [shape = 'u32[144,128]{1,0:T(1,128)}', space=vmem, size = 0x12000, scoped, tag = 'internal scratch']
  %s0 = inlined_call_operand.vmem [shape: f32[8,32], index: 0, kind: input, shape index: {}]
  %s1 = inlined_call_operand.vmem [shape: f32[8,2], index: 1, kind: input, shape index: {}]
  %s2 = inlined_call_operand.hbm [shape: f32[32,64], index: 2, kind: input, shape index: {}]
  %s3 = inlined_call_operand.vmem [shape: f32[1,64], index: 3, kind: input, shape index: {}, may-alias: {3,20}]
  %s4 = inlined_call_operand.vmem [shape: f32[1,64], index: 4, kind: input, shape index: {}, may-alias: {4,21}]
  %s5 = inlined_call_operand.hbm [shape: f32[64,32], index: 5, kind: input, shape index: {}]
  %s6 = inlined_call_operand.vmem [shape: f32[1,32], index: 6, kind: input, shape index: {}, may-alias: {6,17}]
  %s7 = inlined_call_operand.vmem [shape: f32[1,32], index: 7, kind: input, shape index: {}, may-alias: {7,18}]
  %s8 = inlined_call_operand.hbm [shape: f32[32,16], index: 8, kind: input, shape index: {}]
  %s9 = inlined_call_operand.vmem [shape: f32[1,16], index: 9, kind: input, shape index: {}, may-alias: {9,14}]
  %s10 = inlined_call_operand.vmem [shape: f32[1,16], index: 10, kind: input, shape index: {}, may-alias: {10,15}]
  %s11 = inlined_call_operand.hbm [shape: f32[16,128], index: 11, kind: input, shape index: {}]
  %s12 = inlined_call_operand.vmem [shape: f32[1,128], index: 12, kind: input, shape index: {}]
  %s13 = inlined_call_operand.vmem [shape: f32[2,16], index: 13, kind: input, shape index: {}]
  %s14 = inlined_call_operand.vmem [shape: f32[1,16], index: 14, kind: input, shape index: {}, may-alias: {9,14}]
  %s15 = inlined_call_operand.vmem [shape: f32[1,16], index: 15, kind: input, shape index: {}, may-alias: {10,15}]
  %s16 = inlined_call_operand.hbm [shape: f32[16,32], index: 16, kind: input, shape index: {}]
  %s17 = inlined_call_operand.vmem [shape: f32[1,32], index: 17, kind: input, shape index: {}, may-alias: {6,17}]
  %s18 = inlined_call_operand.vmem [shape: f32[1,32], index: 18, kind: input, shape index: {}, may-alias: {7,18}]
  %s19 = inlined_call_operand.hbm [shape: f32[32,64], index: 19, kind: input, shape index: {}]
  %s20 = inlined_call_operand.vmem [shape: f32[1,64], index: 20, kind: input, shape index: {}, may-alias: {3,20}]
  %s21 = inlined_call_operand.vmem [shape: f32[1,64], index: 21, kind: input, shape index: {}, may-alias: {4,21}]
  %s22 = inlined_call_operand.vmem [shape: f32[64,128], index: 22, kind: input, shape index: {}]
  %s23 = inlined_call_operand.vmem [shape: f32[1,128], index: 23, kind: input, shape index: {}]
  %s24 = inlined_call_operand.hbm [shape: f32[8,128], index: 24, kind: output, shape index: {0}]
  %s25 = inlined_call_operand.vmem [shape: f32[8,128], index: 25, kind: output, shape index: {1}]
  %26 = xla_tuple %s24, %s25
  %s27 = sld [smem:[#allocation0]]
  $region138: #{vae_forward.1} parent=0
    _
  %s29 = ssub.s32 1, %s27
  %s30 = scalar_select 0, %s29, %s27
  $region1: #{vae_forward.1} parent=0
    #allocation2 [shape = 'u8[16384]{0}', space=vmem, size = 0x4000, scoped, tag = 'input window, operand 2, single buffered']
    #allocation3 [shape = 's32[1]{0}', space=sflag, size = 0x4, scoped, tag = 'scoped memory for vae_forward.1']
    #allocation4 [shape = 's32[1]{0}', space=sflag, size = 0x4, scoped, tag = 'scoped memory for vae_forward.1']
    #allocation5 [shape = 'u8[32768]{0}', space=vmem, size = 0x8000, scoped, tag = 'input window, operand 5, single buffered']
    #allocation6 [shape = 's32[1]{0}', space=sflag, size = 0x4, scoped, tag = 'scoped memory for vae_forward.1']
    #allocation7 [shape = 'u8[16384]{0}', space=vmem, size = 0x4000, scoped, tag = 'input window, operand 8, single buffered']
    #allocation8 [shape = 'u8[8192]{0}', space=vmem, size = 0x2000, scoped, tag = 'input window, operand 11, single buffered']
    #allocation9 [shape = 's32[1]{0}', space=sflag, size = 0x4, scoped, tag = 'scoped memory for vae_forward.1']
    #allocation10 [shape = 'u8[8192]{0}', space=vmem, size = 0x2000, scoped, tag = 'input window, operand 16, single buffered']
    #allocation11 [shape = 'u8[16384]{0}', space=vmem, size = 0x4000, scoped, tag = 'input window, operand 19, single buffered']
    #allocation12 [shape = 's32[1]{0}', space=sflag, size = 0x4, scoped, tag = 'scoped memory for vae_forward.1']
    #allocation13 [shape = 'u8[4096]{0}', space=vmem, size = 0x1000, scoped, tag = 'output window, operand 0, single buffered']
    %31 = vsyncpa [#allocation3], 0
    %32 = vsyncpa [#allocation6], 0
    %33 = vsyncpa [#allocation9], 0
    %34 = vsyncpa [#allocation12], 0
    %35 = vsyncpa [#allocation4], 0
    // Predicated region
    $region2: #{vae_forward.1} parent=1 // pred_check
      _
    $region3: #{vae_forward.1} parent=1 // pred_check_branch
      %37 = sbr.rel (0) target = $region5
    $region4: #{vae_forward.1} parent=1 // pred_region
      _
    $region5: #{vae_forward.1} parent=1 // pred_fallthru
      _
    // Predicated region
    $region6: #{vae_forward.1} parent=1 // pred_check
      _
    $region7: #{vae_forward.1} parent=1 // pred_check_branch
      %39 = sbr.rel (0) target = $region9
    $region8: #{vae_forward.1} parent=1 // pred_region
      _
    $region9: #{vae_forward.1} parent=1 // pred_fallthru
      _
    // Predicated region
    $region10: #{vae_forward.1} parent=1 // pred_check
      _
    $region11: #{vae_forward.1} parent=1 // pred_check_branch
      %41 = sbr.rel (0) target = $region13
    $region12: #{vae_forward.1} parent=1 // pred_region
      %s43 = ssub.s32 512, 512
      %44 = vsyncadd [#allocation3], %s43
      %s45 = sshll.u32 [#allocation2], 4
      %s46 = int_to_ptr.vmem [resolvable:$true] %s45
      %51 = dma.hbm_to_vmem [thread:$0]  %s2, 512, %s46, [#allocation3], 128, 128, 8
    $region13: #{vae_forward.1} parent=1 // pred_fallthru
      _
    // Predicated region
    $region14: #{vae_forward.1} parent=1 // pred_check
      _
    $region15: #{vae_forward.1} parent=1 // pred_check_branch
      %53 = sbr.rel (0) target = $region17
    $region16: #{vae_forward.1} parent=1 // pred_region
      _
    $region17: #{vae_forward.1} parent=1 // pred_fallthru
      _
    // Predicated region
    $region18: #{vae_forward.1} parent=1 // pred_check
      _
    $region19: #{vae_forward.1} parent=1 // pred_check_branch
      %55 = sbr.rel (0) target = $region21
    $region20: #{vae_forward.1} parent=1 // pred_region
      _
    $region21: #{vae_forward.1} parent=1 // pred_fallthru
      _
    // Predicated region
    $region22: #{vae_forward.1} parent=1 // pred_check
      _
    $region23: #{vae_forward.1} parent=1 // pred_check_branch
      %57 = sbr.rel (0) target = $region25
    $region24: #{vae_forward.1} parent=1 // pred_region
      %s59 = ssub.s32 1024, 1024
      %60 = vsyncadd [#allocation6], %s59
      %s61 = sshll.u32 [#allocation5], 4
      %s62 = int_to_ptr.vmem [resolvable:$true] %s61
      %67 = dma.hbm_to_vmem [thread:$0]  %s5, 1024, %s62, [#allocation6], 128, 128, 8
    $region25: #{vae_forward.1} parent=1 // pred_fallthru
      _
    // Predicated region
    $region26: #{vae_forward.1} parent=1 // pred_check
      _
    $region27: #{vae_forward.1} parent=1 // pred_check_branch
      %69 = sbr.rel (0) target = $region29
    $region28: #{vae_forward.1} parent=1 // pred_region
      _
    $region29: #{vae_forward.1} parent=1 // pred_fallthru
      _
    // Predicated region
    $region30: #{vae_forward.1} parent=1 // pred_check
      _
    $region31: #{vae_forward.1} parent=1 // pred_check_branch
      %71 = sbr.rel (0) target = $region33
    $region32: #{vae_forward.1} parent=1 // pred_region
      _
    $region33: #{vae_forward.1} parent=1 // pred_fallthru
      _
    // Predicated region
    $region34: #{vae_forward.1} parent=1 // pred_check
      _
    $region35: #{vae_forward.1} parent=1 // pred_check_branch
      %73 = sbr.rel (0) target = $region37
    $region36: #{vae_forward.1} parent=1 // pred_region
      %s75 = ssub.s32 512, 512
      %76 = vsyncadd [#allocation6], %s75
      %s77 = sshll.u32 [#allocation7], 4
      %s78 = int_to_ptr.vmem [resolvable:$true] %s77
      %83 = dma.hbm_to_vmem [thread:$0]  %s8, 512, %s78, [#allocation6], 128, 128, 8
    $region37: #{vae_forward.1} parent=1 // pred_fallthru
      _
    // Predicated region
    $region38: #{vae_forward.1} parent=1 // pred_check
      _
    $region39: #{vae_forward.1} parent=1 // pred_check_branch
      %85 = sbr.rel (0) target = $region41
    $region40: #{vae_forward.1} parent=1 // pred_region
      _
    $region41: #{vae_forward.1} parent=1 // pred_fallthru
      _
    // Predicated region
    $region42: #{vae_forward.1} parent=1 // pred_check
      _
    $region43: #{vae_forward.1} parent=1 // pred_check_branch
      %87 = sbr.rel (0) target = $region45
    $region44: #{vae_forward.1} parent=1 // pred_region
      _
    $region45: #{vae_forward.1} parent=1 // pred_fallthru
      _
    // Predicated region
    $region46: #{vae_forward.1} parent=1 // pred_check
      _
    $region47: #{vae_forward.1} parent=1 // pred_check_branch
      %89 = sbr.rel (0) target = $region49
    $region48: #{vae_forward.1} parent=1 // pred_region
      %s91 = ssub.s32 256, 256
      %92 = vsyncadd [#allocation9], %s91
      %s93 = sshll.u32 [#allocation8], 4
      %s94 = int_to_ptr.vmem [resolvable:$true] %s93
      %99 = dma.hbm_to_vmem [thread:$0]  %s11, 256, %s94, [#allocation9], 128, 128, 8
    $region49: #{vae_forward.1} parent=1 // pred_fallthru
      _
    // Predicated region
    $region50: #{vae_forward.1} parent=1 // pred_check
      _
    $region51: #{vae_forward.1} parent=1 // pred_check_branch
      %101 = sbr.rel (0) target = $region53
    $region52: #{vae_forward.1} parent=1 // pred_region
      _
    $region53: #{vae_forward.1} parent=1 // pred_fallthru
      _
    // Predicated region
    $region54: #{vae_forward.1} parent=1 // pred_check
      _
    $region55: #{vae_forward.1} parent=1 // pred_check_branch
      %103 = sbr.rel (0) target = $region57
    $region56: #{vae_forward.1} parent=1 // pred_region
      _
    $region57: #{vae_forward.1} parent=1 // pred_fallthru
      _
    // Predicated region
    $region58: #{vae_forward.1} parent=1 // pred_check
      _
    $region59: #{vae_forward.1} parent=1 // pred_check_branch
      %105 = sbr.rel (0) target = $region61
    $region60: #{vae_forward.1} parent=1 // pred_region
      _
    $region61: #{vae_forward.1} parent=1 // pred_fallthru
      _
    // Predicated region
    $region62: #{vae_forward.1} parent=1 // pred_check
      _
    $region63: #{vae_forward.1} parent=1 // pred_check_branch
      %107 = sbr.rel (0) target = $region65
    $region64: #{vae_forward.1} parent=1 // pred_region
      _
    $region65: #{vae_forward.1} parent=1 // pred_fallthru
      _
    // Predicated region
    $region66: #{vae_forward.1} parent=1 // pred_check
      _
    $region67: #{vae_forward.1} parent=1 // pred_check_branch
      %109 = sbr.rel (0) target = $region69
    $region68: #{vae_forward.1} parent=1 // pred_region
      %s111 = ssub.s32 256, 256
      %112 = vsyncadd [#allocation9], %s111
      %s113 = sshll.u32 [#allocation10], 4
      %s114 = int_to_ptr.vmem [resolvable:$true] %s113
      %119 = dma.hbm_to_vmem [thread:$0]  %s16, 256, %s114, [#allocation9], 128, 128, 8
    $region69: #{vae_forward.1} parent=1 // pred_fallthru
      _
    // Predicated region
    $region70: #{vae_forward.1} parent=1 // pred_check
      _
    $region71: #{vae_forward.1} parent=1 // pred_check_branch
      %121 = sbr.rel (0) target = $region73
    $region72: #{vae_forward.1} parent=1 // pred_region
      _
    $region73: #{vae_forward.1} parent=1 // pred_fallthru
      _
    // Predicated region
    $region74: #{vae_forward.1} parent=1 // pred_check
      _
    $region75: #{vae_forward.1} parent=1 // pred_check_branch
      %123 = sbr.rel (0) target = $region77
    $region76: #{vae_forward.1} parent=1 // pred_region
      _
    $region77: #{vae_forward.1} parent=1 // pred_fallthru
      _
    // Predicated region
    $region78: #{vae_forward.1} parent=1 // pred_check
      _
    $region79: #{vae_forward.1} parent=1 // pred_check_branch
      %125 = sbr.rel (0) target = $region81
    $region80: #{vae_forward.1} parent=1 // pred_region
      %s127 = ssub.s32 512, 512
      %128 = vsyncadd [#allocation12], %s127
      %s129 = sshll.u32 [#allocation11], 4
      %s130 = int_to_ptr.vmem [resolvable:$true] %s129
      %135 = dma.hbm_to_vmem [thread:$0]  %s19, 512, %s130, [#allocation12], 128, 128, 8
    $region81: #{vae_forward.1} parent=1 // pred_fallthru
      _
    // Predicated region
    $region82: #{vae_forward.1} parent=1 // pred_check
      _
    $region83: #{vae_forward.1} parent=1 // pred_check_branch
      %137 = sbr.rel (0) target = $region85
    $region84: #{vae_forward.1} parent=1 // pred_region
      _
    $region85: #{vae_forward.1} parent=1 // pred_fallthru
      _
    // Predicated region
    $region86: #{vae_forward.1} parent=1 // pred_check
      _
    $region87: #{vae_forward.1} parent=1 // pred_check_branch
      %139 = sbr.rel (0) target = $region89
    $region88: #{vae_forward.1} parent=1 // pred_region
      _
    $region89: #{vae_forward.1} parent=1 // pred_fallthru
      _
    // Predicated region
    $region90: #{vae_forward.1} parent=1 // pred_check
      _
    $region91: #{vae_forward.1} parent=1 // pred_check_branch
      %141 = sbr.rel (0) target = $region93
    $region92: #{vae_forward.1} parent=1 // pred_region
      _
    $region93: #{vae_forward.1} parent=1 // pred_fallthru
      _
    // Predicated region
    $region94: #{vae_forward.1} parent=1 // pred_check
      _
    $region95: #{vae_forward.1} parent=1 // pred_check_branch
      %143 = sbr.rel (0) target = $region97
    $region96: #{vae_forward.1} parent=1 // pred_region
      _
    $region97: #{vae_forward.1} parent=1 // pred_fallthru
      _
    // Predicated region
    $region98: #{vae_forward.1} parent=1 // pred_check
      _
    $region99: #{vae_forward.1} parent=1 // pred_check_branch
      %145 = sbr.rel (0) target = $region101
    $region100: #{vae_forward.1} parent=1 // pred_region
      %146 = dma.done [#allocation3], 512
    $region101: #{vae_forward.1} parent=1 // pred_fallthru
      _
    // Predicated region
    $region102: #{vae_forward.1} parent=1 // pred_check
      _
    $region103: #{vae_forward.1} parent=1 // pred_check_branch
      %148 = sbr.rel (0) target = $region105
    $region104: #{vae_forward.1} parent=1 // pred_region
      %149 = dma.done [#allocation6], 1024
    $region105: #{vae_forward.1} parent=1 // pred_fallthru
      _
    // Predicated region
    $region106: #{vae_forward.1} parent=1 // pred_check
      _
    $region107: #{vae_forward.1} parent=1 // pred_check_branch
      %151 = sbr.rel (0) target = $region109
    $region108: #{vae_forward.1} parent=1 // pred_region
      %152 = dma.done [#allocation6], 512
    $region109: #{vae_forward.1} parent=1 // pred_fallthru
      _
    // Predicated region
    $region110: #{vae_forward.1} parent=1 // pred_check
      _
    $region111: #{vae_forward.1} parent=1 // pred_check_branch
      %154 = sbr.rel (0) target = $region113
    $region112: #{vae_forward.1} parent=1 // pred_region
      %155 = dma.done [#allocation9], 256
    $region113: #{vae_forward.1} parent=1 // pred_fallthru
      _
    // Predicated region
    $region114: #{vae_forward.1} parent=1 // pred_check
      _
    $region115: #{vae_forward.1} parent=1 // pred_check_branch
      %157 = sbr.rel (0) target = $region117
    $region116: #{vae_forward.1} parent=1 // pred_region
      %158 = dma.done [#allocation9], 256
    $region117: #{vae_forward.1} parent=1 // pred_fallthru
      _
    // Predicated region
    $region118: #{vae_forward.1} parent=1 // pred_check
      _
    $region119: #{vae_forward.1} parent=1 // pred_check_branch
      %160 = sbr.rel (0) target = $region121
    $region120: #{vae_forward.1} parent=1 // pred_region
      %161 = dma.done [#allocation12], 512
    $region121: #{vae_forward.1} parent=1 // pred_fallthru
      _
    %v162 = vld [vmem:[%s0] sm:$0xff]
    %v163 = vld [vmem:[#allocation2] sm:$0xff]
    %v164 = vld [vmem:[#allocation2 + $0x8] sm:$0xff]
    %v165 = vld [vmem:[#allocation2 + $0x10] sm:$0xff]
    %v166 = vld [vmem:[#allocation2 + $0x18] sm:$0xff]
    %vm167 = vcmask 261120
    %v169 = vsel %vm167, %v162, 0
    %171 = vmatprep.subr.mxu0 0.0
    %172 = vmatpush1.msra.mxu0 %v163
    %173 = vmatprep.subr.mxu0 0.0
    %174 = vmatpush1.msra.mxu0 %v164
    %175 = vmatprep.subr.mxu0 0.0
    %176 = vmatpush1.msra.mxu0 %v165
    %177 = vmatprep.subr.mxu0 0.0
    %178 = vmatpush1.msra.mxu0 %v166
    %179 = vmatprep.subr.mxu0 0.0
    %180 = vmatpush1.msra.mxu0 0.0
    %181 = vmatprep.subr.mxu0 0.0
    %182 = vmatpush1.msra.mxu0 0.0
    %183 = vmatprep.subr.mxu0 0.0
    %184 = vmatpush1.msra.mxu0 0.0
    %185 = vmatprep.subr.mxu0 0.0
    %186 = vmatpush1.msra.mxu0 0.0
    %187 = vmatprep.subr.mxu0 0.0
    %188 = vmatpush1.msra.mxu0 0.0
    %189 = vmatprep.subr.mxu0 0.0
    %190 = vmatpush1.msra.mxu0 0.0
    %191 = vmatprep.subr.mxu0 0.0
    %192 = vmatpush1.msra.mxu0 0.0
    %193 = vmatprep.subr.mxu0 0.0
    %194 = vmatpush1.msra.mxu0 0.0
    %195 = vmatprep.subr.mxu0 0.0
    %196 = vmatpush1.msra.mxu0 0.0
    %197 = vmatprep.subr.mxu0 0.0
    %198 = vmatpush1.msra.mxu0 0.0
    %199 = vmatprep.subr.mxu0 0.0
    %200 = vmatpush1.msra.mxu0 0.0
    %201 = vmatprep.subr.mxu0 0.0
    %202 = vmatpush1.msra.mxu0 0.0
    %203 = vmatprep.subr.mxu0 0.0
    %204 = vmatpush1.msra.mxu0 0.0
    %205 = vmatprep.subr.mxu0 0.0
    %206 = vmatpush1.msra.mxu0 0.0
    %207 = vmatprep.subr.mxu0 0.0
    %208 = vmatpush1.msra.mxu0 0.0
    %209 = vmatprep.subr.mxu0 0.0
    %210 = vmatpush1.msra.mxu0 0.0
    %211 = vmatprep.subr.mxu0 0.0
    %212 = vmatpush1.msra.mxu0 0.0
    %213 = vmatprep.subr.mxu0 0.0
    %214 = vmatpush1.msra.mxu0 0.0
    %215 = vmatprep.subr.mxu0 0.0
    %216 = vmatpush1.msra.mxu0 0.0
    %217 = vmatprep.subr.mxu0 0.0
    %218 = vmatpush1.msra.mxu0 0.0
    %219 = vmatprep.subr.mxu0 0.0
    %220 = vmatpush1.msra.mxu0 0.0
    %221 = vmatprep.subr.mxu0 0.0
    %222 = vmatpush1.msra.mxu0 0.0
    %223 = vmatprep.subr.mxu0 0.0
    %224 = vmatpush1.msra.mxu0 0.0
    %225 = vmatprep.subr.mxu0 0.0
    %226 = vmatpush1.msra.mxu0 0.0
    %227 = vmatprep.subr.mxu0 0.0
    %228 = vmatpush1.msra.mxu0 0.0
    %229 = vmatprep.subr.mxu0 0.0
    %230 = vmatpush1.msra.mxu0 0.0
    %231 = vmatprep.subr.mxu0 0.0
    %232 = vmatpush1.msra.mxu0 0.0
    %233 = vmatprep.subr.mxu0 0.0
    %234 = vmatpush1.msra.mxu0 0.0
    %235 = vmatprep.mubr.f32.mxu0 0.0
    %236 = vmatmul.mubr.f32.gmra.mrb[0].mxu0 %v169
    %v237 = vpop.f32.mrb[0].mxu0
    %v238 = vadd.f32 0.0, %v237
    %v239 = vpop.f32.mrb[0].mxu0
    %240 = vdwg.mxu0
    %v241 = vld [vmem:[%s3] sm:$0x1]
    %v242 = vld [vmem:[%s4] sm:$0x1]
    %vm243 = vcmask 523264
    %v244 = vsel %vm243, %v238, 0.0
    %v245 = vrot.slane %v244, 4
    %v246 = vadd.f32 %v244, %v245
    %v247 = vrot.slane %v246, 2
    %v248 = vadd.f32 %v246, %v247
    %v249 = vrot.slane %v248, 1
    %v250 = vadd.f32 %v248, %v249
    %v251 = vrcp.pop 8.0
    %v252 = vmul.f32 %v250, %v251
    %v253 = vsub.f32 %v238, %v252
    %v254 = vmul.f32 %v253, %v253
    %v255 = vsel %vm243, %v254, 0.0
    %v256 = vrot.slane %v255, 4
    %v257 = vadd.f32 %v255, %v256
    %v258 = vrot.slane %v257, 2
    %v259 = vadd.f32 %v257, %v258
    %v260 = vrot.slane %v259, 1
    %v261 = vadd.f32 %v259, %v260
    %v262 = vmul.f32 %v261, %v251
    %v263 = vadd.f32 %v262, 1e-05
    %v264 = vrsqrt.pop %v263
    %v265 = vmul.f32 %v253, %v264
    %v267 = vlaneseq
    %v268 = vshrl.u32 %v267, 7
    %v269 = vsub.s32 0, %v268
    %v270 = vrot.slane %v241, %v269
    %v272 = vmul.f32 %v265, %v270
    %v274 = vlaneseq
    %v275 = vshrl.u32 %v274, 7
    %v276 = vsub.s32 0, %v275
    %v277 = vrot.slane %v242, %v276
    %v279 = vadd.f32 %v272, %v277
    %v280 = vmax.f32 %v279, 0.0
    %v281 = vld [vmem:[#allocation5] sm:$0xff]
    %v282 = vld [vmem:[#allocation5 + $0x8] sm:$0xff]
    %v283 = vld [vmem:[#allocation5 + $0x10] sm:$0xff]
    %v284 = vld [vmem:[#allocation5 + $0x18] sm:$0xff]
    %v285 = vld [vmem:[#allocation5 + $0x20] sm:$0xff]
    %v286 = vld [vmem:[#allocation5 + $0x28] sm:$0xff]
    %v287 = vld [vmem:[#allocation5 + $0x30] sm:$0xff]
    %v288 = vld [vmem:[#allocation5 + $0x38] sm:$0xff]
    %v290 = vsel %vm243, %v280, 0
    %292 = vmatprep.subr.mxu0 0.0
    %293 = vmatpush1.msra.mxu0 %v281
    %294 = vmatprep.subr.mxu0 0.0
    %295 = vmatpush1.msra.mxu0 %v282
    %296 = vmatprep.subr.mxu0 0.0
    %297 = vmatpush1.msra.mxu0 %v283
    %298 = vmatprep.subr.mxu0 0.0
    %299 = vmatpush1.msra.mxu0 %v284
    %300 = vmatprep.subr.mxu0 0.0
    %301 = vmatpush1.msra.mxu0 %v285
    %302 = vmatprep.subr.mxu0 0.0
    %303 = vmatpush1.msra.mxu0 %v286
    %304 = vmatprep.subr.mxu0 0.0
    %305 = vmatpush1.msra.mxu0 %v287
    %306 = vmatprep.subr.mxu0 0.0
    %307 = vmatpush1.msra.mxu0 %v288
    %308 = vmatprep.subr.mxu0 0.0
    %309 = vmatpush1.msra.mxu0 0.0
    %310 = vmatprep.subr.mxu0 0.0
    %311 = vmatpush1.msra.mxu0 0.0
    %312 = vmatprep.subr.mxu0 0.0
    %313 = vmatpush1.msra.mxu0 0.0
    %314 = vmatprep.subr.mxu0 0.0
    %315 = vmatpush1.msra.mxu0 0.0
    %316 = vmatprep.subr.mxu0 0.0
    %317 = vmatpush1.msra.mxu0 0.0
    %318 = vmatprep.subr.mxu0 0.0
    %319 = vmatpush1.msra.mxu0 0.0
    %320 = vmatprep.subr.mxu0 0.0
    %321 = vmatpush1.msra.mxu0 0.0
    %322 = vmatprep.subr.mxu0 0.0
    %323 = vmatpush1.msra.mxu0 0.0
    %324 = vmatprep.subr.mxu0 0.0
    %325 = vmatpush1.msra.mxu0 0.0
    %326 = vmatprep.subr.mxu0 0.0
    %327 = vmatpush1.msra.mxu0 0.0
    %328 = vmatprep.subr.mxu0 0.0
    %329 = vmatpush1.msra.mxu0 0.0
    %330 = vmatprep.subr.mxu0 0.0
    %331 = vmatpush1.msra.mxu0 0.0
    %332 = vmatprep.subr.mxu0 0.0
    %333 = vmatpush1.msra.mxu0 0.0
    %334 = vmatprep.subr.mxu0 0.0
    %335 = vmatpush1.msra.mxu0 0.0
    %336 = vmatprep.subr.mxu0 0.0
    %337 = vmatpush1.msra.mxu0 0.0
    %338 = vmatprep.subr.mxu0 0.0
    %339 = vmatpush1.msra.mxu0 0.0
    %340 = vmatprep.subr.mxu0 0.0
    %341 = vmatpush1.msra.mxu0 0.0
    %342 = vmatprep.subr.mxu0 0.0
    %343 = vmatpush1.msra.mxu0 0.0
    %344 = vmatprep.subr.mxu0 0.0
    %345 = vmatpush1.msra.mxu0 0.0
    %346 = vmatprep.subr.mxu0 0.0
    %347 = vmatpush1.msra.mxu0 0.0
    %348 = vmatprep.subr.mxu0 0.0
    %349 = vmatpush1.msra.mxu0 0.0
    %350 = vmatprep.subr.mxu0 0.0
    %351 = vmatpush1.msra.mxu0 0.0
    %352 = vmatprep.subr.mxu0 0.0
    %353 = vmatpush1.msra.mxu0 0.0
    %354 = vmatprep.subr.mxu0 0.0
    %355 = vmatpush1.msra.mxu0 0.0
    %356 = vmatprep.mubr.f32.mxu0 0.0
    %357 = vmatmul.mubr.f32.gmra.mrb[0].mxu0 %v290
    %v358 = vpop.f32.mrb[0].mxu0
    %v359 = vadd.f32 0.0, %v358
    %v360 = vpop.f32.mrb[0].mxu0
    %361 = vdwg.mxu0
    %v362 = vld [vmem:[%s6] sm:$0x1]
    %v363 = vld [vmem:[%s7] sm:$0x1]
    %v364 = vsel %vm167, %v359, 0.0
    %v365 = vrot.slane %v364, 4
    %v366 = vadd.f32 %v364, %v365
    %v367 = vrot.slane %v366, 2
    %v368 = vadd.f32 %v366, %v367
    %v369 = vrot.slane %v368, 1
    %v370 = vadd.f32 %v368, %v369
    %v371 = vmul.f32 %v370, %v251
    %v372 = vsub.f32 %v359, %v371
    %v373 = vmul.f32 %v372, %v372
    %v374 = vsel %vm167, %v373, 0.0
    %v375 = vrot.slane %v374, 4
    %v376 = vadd.f32 %v374, %v375
    %v377 = vrot.slane %v376, 2
    %v378 = vadd.f32 %v376, %v377
    %v379 = vrot.slane %v378, 1
    %v380 = vadd.f32 %v378, %v379
    %v381 = vmul.f32 %v380, %v251
    %v382 = vadd.f32 %v381, 1e-05
    %v383 = vrsqrt.pop %v382
    %v384 = vmul.f32 %v372, %v383
    %v386 = vlaneseq
    %v387 = vshrl.u32 %v386, 7
    %v388 = vsub.s32 0, %v387
    %v389 = vrot.slane %v362, %v388
    %v391 = vmul.f32 %v384, %v389
    %v393 = vlaneseq
    %v394 = vshrl.u32 %v393, 7
    %v395 = vsub.s32 0, %v394
    %v396 = vrot.slane %v363, %v395
    %v398 = vadd.f32 %v391, %v396
    %v399 = vmax.f32 %v398, 0.0
    %v400 = vld [vmem:[#allocation7] sm:$0xff]
    %v401 = vld [vmem:[#allocation7 + $0x8] sm:$0xff]
    %v402 = vld [vmem:[#allocation7 + $0x10] sm:$0xff]
    %v403 = vld [vmem:[#allocation7 + $0x18] sm:$0xff]
    %v405 = vsel %vm167, %v399, 0
    %407 = vmatprep.subr.mxu0 0.0
    %408 = vmatpush1.msra.mxu0 %v400
    %409 = vmatprep.subr.mxu0 0.0
    %410 = vmatpush1.msra.mxu0 %v401
    %411 = vmatprep.subr.mxu0 0.0
    %412 = vmatpush1.msra.mxu0 %v402
    %413 = vmatprep.subr.mxu0 0.0
    %414 = vmatpush1.msra.mxu0 %v403
    %415 = vmatprep.subr.mxu0 0.0
    %416 = vmatpush1.msra.mxu0 0.0
    %417 = vmatprep.subr.mxu0 0.0
    %418 = vmatpush1.msra.mxu0 0.0
    %419 = vmatprep.subr.mxu0 0.0
    %420 = vmatpush1.msra.mxu0 0.0
    %421 = vmatprep.subr.mxu0 0.0
    %422 = vmatpush1.msra.mxu0 0.0
    %423 = vmatprep.subr.mxu0 0.0
    %424 = vmatpush1.msra.mxu0 0.0
    %425 = vmatprep.subr.mxu0 0.0
    %426 = vmatpush1.msra.mxu0 0.0
    %427 = vmatprep.subr.mxu0 0.0
    %428 = vmatpush1.msra.mxu0 0.0
    %429 = vmatprep.subr.mxu0 0.0
    %430 = vmatpush1.msra.mxu0 0.0
    %431 = vmatprep.subr.mxu0 0.0
    %432 = vmatpush1.msra.mxu0 0.0
    %433 = vmatprep.subr.mxu0 0.0
    %434 = vmatpush1.msra.mxu0 0.0
    %435 = vmatprep.subr.mxu0 0.0
    %436 = vmatpush1.msra.mxu0 0.0
    %437 = vmatprep.subr.mxu0 0.0
    %438 = vmatpush1.msra.mxu0 0.0
    %439 = vmatprep.subr.mxu0 0.0
    %440 = vmatpush1.msra.mxu0 0.0
    %441 = vmatprep.subr.mxu0 0.0
    %442 = vmatpush1.msra.mxu0 0.0
    %443 = vmatprep.subr.mxu0 0.0
    %444 = vmatpush1.msra.mxu0 0.0
    %445 = vmatprep.subr.mxu0 0.0
    %446 = vmatpush1.msra.mxu0 0.0
    %447 = vmatprep.subr.mxu0 0.0
    %448 = vmatpush1.msra.mxu0 0.0
    %449 = vmatprep.subr.mxu0 0.0
    %450 = vmatpush1.msra.mxu0 0.0
    %451 = vmatprep.subr.mxu0 0.0
    %452 = vmatpush1.msra.mxu0 0.0
    %453 = vmatprep.subr.mxu0 0.0
    %454 = vmatpush1.msra.mxu0 0.0
    %455 = vmatprep.subr.mxu0 0.0
    %456 = vmatpush1.msra.mxu0 0.0
    %457 = vmatprep.subr.mxu0 0.0
    %458 = vmatpush1.msra.mxu0 0.0
    %459 = vmatprep.subr.mxu0 0.0
    %460 = vmatpush1.msra.mxu0 0.0
    %461 = vmatprep.subr.mxu0 0.0
    %462 = vmatpush1.msra.mxu0 0.0
    %463 = vmatprep.subr.mxu0 0.0
    %464 = vmatpush1.msra.mxu0 0.0
    %465 = vmatprep.subr.mxu0 0.0
    %466 = vmatpush1.msra.mxu0 0.0
    %467 = vmatprep.subr.mxu0 0.0
    %468 = vmatpush1.msra.mxu0 0.0
    %469 = vmatprep.subr.mxu0 0.0
    %470 = vmatpush1.msra.mxu0 0.0
    %471 = vmatprep.mubr.f32.mxu0 0.0
    %472 = vmatmul.mubr.f32.gmra.mrb[0].mxu0 %v405
    %v473 = vpop.f32.mrb[0].mxu0
    %v474 = vadd.f32 0.0, %v473
    %v475 = vpop.f32.mrb[0].mxu0
    %476 = vdwg.mxu0
    %v477 = vld [vmem:[%s9] sm:$0x1]
    %v478 = vld [vmem:[%s10] sm:$0x1]
    %vm479 = vcmask 130048
    %v480 = vsel %vm479, %v474, 0.0
    %v481 = vrot.slane %v480, 4
    %v482 = vadd.f32 %v480, %v481
    %v483 = vrot.slane %v482, 2
    %v484 = vadd.f32 %v482, %v483
    %v485 = vrot.slane %v484, 1
    %v486 = vadd.f32 %v484, %v485
    %v487 = vmul.f32 %v486, %v251
    %v488 = vsub.f32 %v474, %v487
    %v489 = vmul.f32 %v488, %v488
    %v490 = vsel %vm479, %v489, 0.0
    %v491 = vrot.slane %v490, 4
    %v492 = vadd.f32 %v490, %v491
    %v493 = vrot.slane %v492, 2
    %v494 = vadd.f32 %v492, %v493
    %v495 = vrot.slane %v494, 1
    %v496 = vadd.f32 %v494, %v495
    %v497 = vmul.f32 %v496, %v251
    %v498 = vadd.f32 %v497, 1e-05
    %v499 = vrsqrt.pop %v498
    %v500 = vmul.f32 %v488, %v499
    %v502 = vlaneseq
    %v503 = vshrl.u32 %v502, 7
    %v504 = vsub.s32 0, %v503
    %v505 = vrot.slane %v477, %v504
    %v507 = vmul.f32 %v500, %v505
    %v509 = vlaneseq
    %v510 = vshrl.u32 %v509, 7
    %v511 = vsub.s32 0, %v510
    %v512 = vrot.slane %v478, %v511
    %v514 = vadd.f32 %v507, %v512
    %v515 = vmax.f32 %v514, 0.0
    %v516 = vld [vmem:[#allocation8] sm:$0xff]
    %v517 = vld [vmem:[#allocation8 + $0x8] sm:$0xff]
    %v518 = vld [vmem:[%s12] sm:$0x1]
    %v520 = vlaneseq
    %v521 = vshrl.u32 %v520, 7
    %v522 = vsub.s32 0, %v521
    %v523 = vrot.slane %v518, %v522
    %v526 = vsel %vm479, %v515, 0
    %528 = vmatprep.subr.mxu0 0.0
    %529 = vmatpush1.msra.mxu0 %v516
    %530 = vmatprep.subr.mxu0 0.0
    %531 = vmatpush1.msra.mxu0 %v517
    %532 = vmatprep.subr.mxu0 0.0
    %533 = vmatpush1.msra.mxu0 0.0
    %534 = vmatprep.subr.mxu0 0.0
    %535 = vmatpush1.msra.mxu0 0.0
    %536 = vmatprep.subr.mxu0 0.0
    %537 = vmatpush1.msra.mxu0 0.0
    %538 = vmatprep.subr.mxu0 0.0
    %539 = vmatpush1.msra.mxu0 0.0
    %540 = vmatprep.subr.mxu0 0.0
    %541 = vmatpush1.msra.mxu0 0.0
    %542 = vmatprep.subr.mxu0 0.0
    %543 = vmatpush1.msra.mxu0 0.0
    %544 = vmatprep.subr.mxu0 0.0
    %545 = vmatpush1.msra.mxu0 0.0
    %546 = vmatprep.subr.mxu0 0.0
    %547 = vmatpush1.msra.mxu0 0.0
    %548 = vmatprep.subr.mxu0 0.0
    %549 = vmatpush1.msra.mxu0 0.0
    %550 = vmatprep.subr.mxu0 0.0
    %551 = vmatpush1.msra.mxu0 0.0
    %552 = vmatprep.subr.mxu0 0.0
    %553 = vmatpush1.msra.mxu0 0.0
    %554 = vmatprep.subr.mxu0 0.0
    %555 = vmatpush1.msra.mxu0 0.0
    %556 = vmatprep.subr.mxu0 0.0
    %557 = vmatpush1.msra.mxu0 0.0
    %558 = vmatprep.subr.mxu0 0.0
    %559 = vmatpush1.msra.mxu0 0.0
    %560 = vmatprep.subr.mxu0 0.0
    %561 = vmatpush1.msra.mxu0 0.0
    %562 = vmatprep.subr.mxu0 0.0
    %563 = vmatpush1.msra.mxu0 0.0
    %564 = vmatprep.subr.mxu0 0.0
    %565 = vmatpush1.msra.mxu0 0.0
    %566 = vmatprep.subr.mxu0 0.0
    %567 = vmatpush1.msra.mxu0 0.0
    %568 = vmatprep.subr.mxu0 0.0
    %569 = vmatpush1.msra.mxu0 0.0
    %570 = vmatprep.subr.mxu0 0.0
    %571 = vmatpush1.msra.mxu0 0.0
    %572 = vmatprep.subr.mxu0 0.0
    %573 = vmatpush1.msra.mxu0 0.0
    %574 = vmatprep.subr.mxu0 0.0
    %575 = vmatpush1.msra.mxu0 0.0
    %576 = vmatprep.subr.mxu0 0.0
    %577 = vmatpush1.msra.mxu0 0.0
    %578 = vmatprep.subr.mxu0 0.0
    %579 = vmatpush1.msra.mxu0 0.0
    %580 = vmatprep.subr.mxu0 0.0
    %581 = vmatpush1.msra.mxu0 0.0
    %582 = vmatprep.subr.mxu0 0.0
    %583 = vmatpush1.msra.mxu0 0.0
    %584 = vmatprep.subr.mxu0 0.0
    %585 = vmatpush1.msra.mxu0 0.0
    %586 = vmatprep.subr.mxu0 0.0
    %587 = vmatpush1.msra.mxu0 0.0
    %588 = vmatprep.subr.mxu0 0.0
    %589 = vmatpush1.msra.mxu0 0.0
    %590 = vmatprep.subr.mxu0 0.0
    %591 = vmatpush1.msra.mxu0 0.0
    %592 = vmatprep.mubr.f32.mxu0 0.0
    %593 = vmatmul.mubr.f32.gmra.mrb[0].mxu0 %v526
    %v594 = vpop.f32.mrb[0].mxu0
    %v595 = vadd.f32 %v523, %v594
    %v596 = vpop.f32.mrb[0].mxu0
    %597 = vdwg.mxu0
    %v598 = vld [vmem:[%s1] sm:$0xff]
    %v599 = vmul.f32 %v595, 0.5
    %v600 = vmul.f32 %v599, 1.442695
    %v601 = vpow.pop %v600
    %603 = vrot.lane.b32.xlu0 %v601, 64
    %v604 = vpop.permute.xlu0 %603
    %v606 = vmul.f32 %v598, %v604
    %v607 = vadd.f32 %v595, %v606
    %v608 = vld [vmem:[%s13] sm:$0x3]
    %vm609 = vcmask 15360
    %v611 = vsel %vm609, %v607, 0
    %vm613 = vcmask 1041408
    %v615 = vsel %vm613, %v608, 0
    %617 = vmatprep.subr.mxu0 0.0
    %618 = vmatpush1.msra.mxu0 %v615
    %619 = vmatprep.subr.mxu0 0.0
    %620 = vmatpush1.msra.mxu0 0.0
    %621 = vmatprep.subr.mxu0 0.0
    %622 = vmatpush1.msra.mxu0 0.0
    %623 = vmatprep.subr.mxu0 0.0
    %624 = vmatpush1.msra.mxu0 0.0
    %625 = vmatprep.subr.mxu0 0.0
    %626 = vmatpush1.msra.mxu0 0.0
    %627 = vmatprep.subr.mxu0 0.0
    %628 = vmatpush1.msra.mxu0 0.0
    %629 = vmatprep.subr.mxu0 0.0
    %630 = vmatpush1.msra.mxu0 0.0
    %631 = vmatprep.subr.mxu0 0.0
    %632 = vmatpush1.msra.mxu0 0.0
    %633 = vmatprep.subr.mxu0 0.0
    %634 = vmatpush1.msra.mxu0 0.0
    %635 = vmatprep.subr.mxu0 0.0
    %636 = vmatpush1.msra.mxu0 0.0
    %637 = vmatprep.subr.mxu0 0.0
    %638 = vmatpush1.msra.mxu0 0.0
    %639 = vmatprep.subr.mxu0 0.0
    %640 = vmatpush1.msra.mxu0 0.0
    %641 = vmatprep.subr.mxu0 0.0
    %642 = vmatpush1.msra.mxu0 0.0
    %643 = vmatprep.subr.mxu0 0.0
    %644 = vmatpush1.msra.mxu0 0.0
    %645 = vmatprep.subr.mxu0 0.0
    %646 = vmatpush1.msra.mxu0 0.0
    %647 = vmatprep.subr.mxu0 0.0
    %648 = vmatpush1.msra.mxu0 0.0
    %649 = vmatprep.subr.mxu0 0.0
    %650 = vmatpush1.msra.mxu0 0.0
    %651 = vmatprep.subr.mxu0 0.0
    %652 = vmatpush1.msra.mxu0 0.0
    %653 = vmatprep.subr.mxu0 0.0
    %654 = vmatpush1.msra.mxu0 0.0
    %655 = vmatprep.subr.mxu0 0.0
    %656 = vmatpush1.msra.mxu0 0.0
    %657 = vmatprep.subr.mxu0 0.0
    %658 = vmatpush1.msra.mxu0 0.0
    %659 = vmatprep.subr.mxu0 0.0
    %660 = vmatpush1.msra.mxu0 0.0
    %661 = vmatprep.subr.mxu0 0.0
    %662 = vmatpush1.msra.mxu0 0.0
    %663 = vmatprep.subr.mxu0 0.0
    %664 = vmatpush1.msra.mxu0 0.0
    %665 = vmatprep.subr.mxu0 0.0
    %666 = vmatpush1.msra.mxu0 0.0
    %667 = vmatprep.subr.mxu0 0.0
    %668 = vmatpush1.msra.mxu0 0.0
    %669 = vmatprep.subr.mxu0 0.0
    %670 = vmatpush1.msra.mxu0 0.0
    %671 = vmatprep.subr.mxu0 0.0
    %672 = vmatpush1.msra.mxu0 0.0
    %673 = vmatprep.subr.mxu0 0.0
    %674 = vmatpush1.msra.mxu0 0.0
    %675 = vmatprep.subr.mxu0 0.0
    %676 = vmatpush1.msra.mxu0 0.0
    %677 = vmatprep.subr.mxu0 0.0
    %678 = vmatpush1.msra.mxu0 0.0
    %679 = vmatprep.subr.mxu0 0.0
    %680 = vmatpush1.msra.mxu0 0.0
    %681 = vmatprep.mubr.f32.mxu0 0.0
    %682 = vmatmul.mubr.f32.gmra.mrb[0].mxu0 %v611
    %v683 = vpop.f32.mrb[0].mxu0
    %v684 = vadd.f32 0.0, %v683
    %v685 = vpop.f32.mrb[0].mxu0
    %686 = vdwg.mxu0
    %v687 = vld [vmem:[%s14] sm:$0x1]
    %v688 = vld [vmem:[%s15] sm:$0x1]
    %v689 = vsel %vm479, %v684, 0.0
    %v690 = vrot.slane %v689, 4
    %v691 = vadd.f32 %v689, %v690
    %v692 = vrot.slane %v691, 2
    %v693 = vadd.f32 %v691, %v692
    %v694 = vrot.slane %v693, 1
    %v695 = vadd.f32 %v693, %v694
    %v696 = vmul.f32 %v695, %v251
    %v697 = vsub.f32 %v684, %v696
    %v698 = vmul.f32 %v697, %v697
    %v699 = vsel %vm479, %v698, 0.0
    %v700 = vrot.slane %v699, 4
    %v701 = vadd.f32 %v699, %v700
    %v702 = vrot.slane %v701, 2
    %v703 = vadd.f32 %v701, %v702
    %v704 = vrot.slane %v703, 1
    %v705 = vadd.f32 %v703, %v704
    %v706 = vmul.f32 %v705, %v251
    %v707 = vadd.f32 %v706, 1e-05
    %v708 = vrsqrt.pop %v707
    %v709 = vmul.f32 %v697, %v708
    %v711 = vlaneseq
    %v712 = vshrl.u32 %v711, 7
    %v713 = vsub.s32 0, %v712
    %v714 = vrot.slane %v687, %v713
    %v716 = vmul.f32 %v709, %v714
    %v718 = vlaneseq
    %v719 = vshrl.u32 %v718, 7
    %v720 = vsub.s32 0, %v719
    %v721 = vrot.slane %v688, %v720
    %v723 = vadd.f32 %v716, %v721
    %v724 = vmax.f32 %v723, 0.0
    %v725 = vld [vmem:[#allocation10] sm:$0xff]
    %v726 = vld [vmem:[#allocation10 + $0x8] sm:$0xff]
    %v728 = vsel %vm479, %v724, 0
    %730 = vmatprep.subr.mxu0 0.0
    %731 = vmatpush1.msra.mxu0 %v725
    %732 = vmatprep.subr.mxu0 0.0
    %733 = vmatpush1.msra.mxu0 %v726
    %734 = vmatprep.subr.mxu0 0.0
    %735 = vmatpush1.msra.mxu0 0.0
    %736 = vmatprep.subr.mxu0 0.0
    %737 = vmatpush1.msra.mxu0 0.0
    %738 = vmatprep.subr.mxu0 0.0
    %739 = vmatpush1.msra.mxu0 0.0
    %740 = vmatprep.subr.mxu0 0.0
    %741 = vmatpush1.msra.mxu0 0.0
    %742 = vmatprep.subr.mxu0 0.0
    %743 = vmatpush1.msra.mxu0 0.0
    %744 = vmatprep.subr.mxu0 0.0
    %745 = vmatpush1.msra.mxu0 0.0
    %746 = vmatprep.subr.mxu0 0.0
    %747 = vmatpush1.msra.mxu0 0.0
    %748 = vmatprep.subr.mxu0 0.0
    %749 = vmatpush1.msra.mxu0 0.0
    %750 = vmatprep.subr.mxu0 0.0
    %751 = vmatpush1.msra.mxu0 0.0
    %752 = vmatprep.subr.mxu0 0.0
    %753 = vmatpush1.msra.mxu0 0.0
    %754 = vmatprep.subr.mxu0 0.0
    %755 = vmatpush1.msra.mxu0 0.0
    %756 = vmatprep.subr.mxu0 0.0
    %757 = vmatpush1.msra.mxu0 0.0
    %758 = vmatprep.subr.mxu0 0.0
    %759 = vmatpush1.msra.mxu0 0.0
    %760 = vmatprep.subr.mxu0 0.0
    %761 = vmatpush1.msra.mxu0 0.0
    %762 = vmatprep.subr.mxu0 0.0
    %763 = vmatpush1.msra.mxu0 0.0
    %764 = vmatprep.subr.mxu0 0.0
    %765 = vmatpush1.msra.mxu0 0.0
    %766 = vmatprep.subr.mxu0 0.0
    %767 = vmatpush1.msra.mxu0 0.0
    %768 = vmatprep.subr.mxu0 0.0
    %769 = vmatpush1.msra.mxu0 0.0
    %770 = vmatprep.subr.mxu0 0.0
    %771 = vmatpush1.msra.mxu0 0.0
    %772 = vmatprep.subr.mxu0 0.0
    %773 = vmatpush1.msra.mxu0 0.0
    %774 = vmatprep.subr.mxu0 0.0
    %775 = vmatpush1.msra.mxu0 0.0
    %776 = vmatprep.subr.mxu0 0.0
    %777 = vmatpush1.msra.mxu0 0.0
    %778 = vmatprep.subr.mxu0 0.0
    %779 = vmatpush1.msra.mxu0 0.0
    %780 = vmatprep.subr.mxu0 0.0
    %781 = vmatpush1.msra.mxu0 0.0
    %782 = vmatprep.subr.mxu0 0.0
    %783 = vmatpush1.msra.mxu0 0.0
    %784 = vmatprep.subr.mxu0 0.0
    %785 = vmatpush1.msra.mxu0 0.0
    %786 = vmatprep.subr.mxu0 0.0
    %787 = vmatpush1.msra.mxu0 0.0
    %788 = vmatprep.subr.mxu0 0.0
    %789 = vmatpush1.msra.mxu0 0.0
    %790 = vmatprep.subr.mxu0 0.0
    %791 = vmatpush1.msra.mxu0 0.0
    %792 = vmatprep.subr.mxu0 0.0
    %793 = vmatpush1.msra.mxu0 0.0
    %794 = vmatprep.mubr.f32.mxu0 0.0
    %795 = vmatmul.mubr.f32.gmra.mrb[0].mxu0 %v728
    %v796 = vpop.f32.mrb[0].mxu0
    %v797 = vadd.f32 0.0, %v796
    %v798 = vpop.f32.mrb[0].mxu0
    %799 = vdwg.mxu0
    %v800 = vld [vmem:[%s17] sm:$0x1]
    %v801 = vld [vmem:[%s18] sm:$0x1]
    %v802 = vsel %vm167, %v797, 0.0
    %v803 = vrot.slane %v802, 4
    %v804 = vadd.f32 %v802, %v803
    %v805 = vrot.slane %v804, 2
    %v806 = vadd.f32 %v804, %v805
    %v807 = vrot.slane %v806, 1
    %v808 = vadd.f32 %v806, %v807
    %v809 = vmul.f32 %v808, %v251
    %v810 = vsub.f32 %v797, %v809
    %v811 = vmul.f32 %v810, %v810
    %v812 = vsel %vm167, %v811, 0.0
    %v813 = vrot.slane %v812, 4
    %v814 = vadd.f32 %v812, %v813
    %v815 = vrot.slane %v814, 2
    %v816 = vadd.f32 %v814, %v815
    %v817 = vrot.slane %v816, 1
    %v818 = vadd.f32 %v816, %v817
    %v819 = vmul.f32 %v818, %v251
    %v820 = vadd.f32 %v819, 1e-05
    %v821 = vrsqrt.pop %v820
    %v822 = vmul.f32 %v810, %v821
    %v824 = vlaneseq
    %v825 = vshrl.u32 %v824, 7
    %v826 = vsub.s32 0, %v825
    %v827 = vrot.slane %v800, %v826
    %v829 = vmul.f32 %v822, %v827
    %v831 = vlaneseq
    %v832 = vshrl.u32 %v831, 7
    %v833 = vsub.s32 0, %v832
    %v834 = vrot.slane %v801, %v833
    %v836 = vadd.f32 %v829, %v834
    %v837 = vmax.f32 %v836, 0.0
    %v838 = vld [vmem:[#allocation11] sm:$0xff]
    %v839 = vld [vmem:[#allocation11 + $0x8] sm:$0xff]
    %v840 = vld [vmem:[#allocation11 + $0x10] sm:$0xff]
    %v841 = vld [vmem:[#allocation11 + $0x18] sm:$0xff]
    %v843 = vsel %vm167, %v837, 0
    %845 = vmatprep.subr.mxu0 0.0
    %846 = vmatpush1.msra.mxu0 %v838
    %847 = vmatprep.subr.mxu0 0.0
    %848 = vmatpush1.msra.mxu0 %v839
    %849 = vmatprep.subr.mxu0 0.0
    %850 = vmatpush1.msra.mxu0 %v840
    %851 = vmatprep.subr.mxu0 0.0
    %852 = vmatpush1.msra.mxu0 %v841
    %853 = vmatprep.subr.mxu0 0.0
    %854 = vmatpush1.msra.mxu0 0.0
    %855 = vmatprep.subr.mxu0 0.0
    %856 = vmatpush1.msra.mxu0 0.0
    %857 = vmatprep.subr.mxu0 0.0
    %858 = vmatpush1.msra.mxu0 0.0
    %859 = vmatprep.subr.mxu0 0.0
    %860 = vmatpush1.msra.mxu0 0.0
    %861 = vmatprep.subr.mxu0 0.0
    %862 = vmatpush1.msra.mxu0 0.0
    %863 = vmatprep.subr.mxu0 0.0
    %864 = vmatpush1.msra.mxu0 0.0
    %865 = vmatprep.subr.mxu0 0.0
    %866 = vmatpush1.msra.mxu0 0.0
    %867 = vmatprep.subr.mxu0 0.0
    %868 = vmatpush1.msra.mxu0 0.0
    %869 = vmatprep.subr.mxu0 0.0
    %870 = vmatpush1.msra.mxu0 0.0
    %871 = vmatprep.subr.mxu0 0.0
    %872 = vmatpush1.msra.mxu0 0.0
    %873 = vmatprep.subr.mxu0 0.0
    %874 = vmatpush1.msra.mxu0 0.0
    %875 = vmatprep.subr.mxu0 0.0
    %876 = vmatpush1.msra.mxu0 0.0
    %877 = vmatprep.subr.mxu0 0.0
    %878 = vmatpush1.msra.mxu0 0.0
    %879 = vmatprep.subr.mxu0 0.0
    %880 = vmatpush1.msra.mxu0 0.0
    %881 = vmatprep.subr.mxu0 0.0
    %882 = vmatpush1.msra.mxu0 0.0
    %883 = vmatprep.subr.mxu0 0.0
    %884 = vmatpush1.msra.mxu0 0.0
    %885 = vmatprep.subr.mxu0 0.0
    %886 = vmatpush1.msra.mxu0 0.0
    %887 = vmatprep.subr.mxu0 0.0
    %888 = vmatpush1.msra.mxu0 0.0
    %889 = vmatprep.subr.mxu0 0.0
    %890 = vmatpush1.msra.mxu0 0.0
    %891 = vmatprep.subr.mxu0 0.0
    %892 = vmatpush1.msra.mxu0 0.0
    %893 = vmatprep.subr.mxu0 0.0
    %894 = vmatpush1.msra.mxu0 0.0
    %895 = vmatprep.subr.mxu0 0.0
    %896 = vmatpush1.msra.mxu0 0.0
    %897 = vmatprep.subr.mxu0 0.0
    %898 = vmatpush1.msra.mxu0 0.0
    %899 = vmatprep.subr.mxu0 0.0
    %900 = vmatpush1.msra.mxu0 0.0
    %901 = vmatprep.subr.mxu0 0.0
    %902 = vmatpush1.msra.mxu0 0.0
    %903 = vmatprep.subr.mxu0 0.0
    %904 = vmatpush1.msra.mxu0 0.0
    %905 = vmatprep.subr.mxu0 0.0
    %906 = vmatpush1.msra.mxu0 0.0
    %907 = vmatprep.subr.mxu0 0.0
    %908 = vmatpush1.msra.mxu0 0.0
    %909 = vmatprep.mubr.f32.mxu0 0.0
    %910 = vmatmul.mubr.f32.gmra.mrb[0].mxu0 %v843
    %v911 = vpop.f32.mrb[0].mxu0
    %v912 = vadd.f32 0.0, %v911
    %v913 = vpop.f32.mrb[0].mxu0
    %914 = vdwg.mxu0
    %v915 = vld [vmem:[%s20] sm:$0x1]
    %v916 = vld [vmem:[%s21] sm:$0x1]
    %v917 = vsel %vm243, %v912, 0.0
    %v918 = vrot.slane %v917, 4
    %v919 = vadd.f32 %v917, %v918
    %v920 = vrot.slane %v919, 2
    %v921 = vadd.f32 %v919, %v920
    %v922 = vrot.slane %v921, 1
    %v923 = vadd.f32 %v921, %v922
    %v924 = vmul.f32 %v923, %v251
    %v925 = vsub.f32 %v912, %v924
    %v926 = vmul.f32 %v925, %v925
    %v927 = vsel %vm243, %v926, 0.0
    %v928 = vrot.slane %v927, 4
    %v929 = vadd.f32 %v927, %v928
    %v930 = vrot.slane %v929, 2
    %v931 = vadd.f32 %v929, %v930
    %v932 = vrot.slane %v931, 1
    %v933 = vadd.f32 %v931, %v932
    %v934 = vmul.f32 %v933, %v251
    %v935 = vadd.f32 %v934, 1e-05
    %v936 = vrsqrt.pop %v935
    %v937 = vmul.f32 %v925, %v936
    %v939 = vlaneseq
    %v940 = vshrl.u32 %v939, 7
    %v941 = vsub.s32 0, %v940
    %v942 = vrot.slane %v915, %v941
    %v944 = vmul.f32 %v937, %v942
    %v946 = vlaneseq
    %v947 = vshrl.u32 %v946, 7
    %v948 = vsub.s32 0, %v947
    %v949 = vrot.slane %v916, %v948
    %v951 = vadd.f32 %v944, %v949
    %v952 = vmax.f32 %v951, 0.0
    %v953 = vld [vmem:[%s22] sm:$0xff]
    %v954 = vld [vmem:[%s22 + $0x8] sm:$0xff]
    %v955 = vld [vmem:[%s22 + $0x10] sm:$0xff]
    %v956 = vld [vmem:[%s22 + $0x18] sm:$0xff]
    %v957 = vld [vmem:[%s22 + $0x20] sm:$0xff]
    %v958 = vld [vmem:[%s22 + $0x28] sm:$0xff]
    %v959 = vld [vmem:[%s22 + $0x30] sm:$0xff]
    %v960 = vld [vmem:[%s22 + $0x38] sm:$0xff]
    %v961 = vld [vmem:[%s23] sm:$0x1]
    %v963 = vlaneseq
    %v964 = vshrl.u32 %v963, 7
    %v965 = vsub.s32 0, %v964
    %v966 = vrot.slane %v961, %v965
    %v969 = vsel %vm243, %v952, 0
    %971 = vmatprep.subr.mxu0 0.0
    %972 = vmatpush1.msra.mxu0 %v953
    %973 = vmatprep.subr.mxu0 0.0
    %974 = vmatpush1.msra.mxu0 %v954
    %975 = vmatprep.subr.mxu0 0.0
    %976 = vmatpush1.msra.mxu0 %v955
    %977 = vmatprep.subr.mxu0 0.0
    %978 = vmatpush1.msra.mxu0 %v956
    %979 = vmatprep.subr.mxu0 0.0
    %980 = vmatpush1.msra.mxu0 %v957
    %981 = vmatprep.subr.mxu0 0.0
    %982 = vmatpush1.msra.mxu0 %v958
    %983 = vmatprep.subr.mxu0 0.0
    %984 = vmatpush1.msra.mxu0 %v959
    %985 = vmatprep.subr.mxu0 0.0
    %986 = vmatpush1.msra.mxu0 %v960
    %987 = vmatprep.subr.mxu0 0.0
    %988 = vmatpush1.msra.mxu0 0.0
    %989 = vmatprep.subr.mxu0 0.0
    %990 = vmatpush1.msra.mxu0 0.0
    %991 = vmatprep.subr.mxu0 0.0
    %992 = vmatpush1.msra.mxu0 0.0
    %993 = vmatprep.subr.mxu0 0.0
    %994 = vmatpush1.msra.mxu0 0.0
    %995 = vmatprep.subr.mxu0 0.0
    %996 = vmatpush1.msra.mxu0 0.0
    %997 = vmatprep.subr.mxu0 0.0
    %998 = vmatpush1.msra.mxu0 0.0
    %999 = vmatprep.subr.mxu0 0.0
    %1000 = vmatpush1.msra.mxu0 0.0
    %1001 = vmatprep.subr.mxu0 0.0
    %1002 = vmatpush1.msra.mxu0 0.0
    %1003 = vmatprep.subr.mxu0 0.0
    %1004 = vmatpush1.msra.mxu0 0.0
    %1005 = vmatprep.subr.mxu0 0.0
    %1006 = vmatpush1.msra.mxu0 0.0
    %1007 = vmatprep.subr.mxu0 0.0
    %1008 = vmatpush1.msra.mxu0 0.0
    %1009 = vmatprep.subr.mxu0 0.0
    %1010 = vmatpush1.msra.mxu0 0.0
    %1011 = vmatprep.subr.mxu0 0.0
    %1012 = vmatpush1.msra.mxu0 0.0
    %1013 = vmatprep.subr.mxu0 0.0
    %1014 = vmatpush1.msra.mxu0 0.0
    %1015 = vmatprep.subr.mxu0 0.0
    %1016 = vmatpush1.msra.mxu0 0.0
    %1017 = vmatprep.subr.mxu0 0.0
    %1018 = vmatpush1.msra.mxu0 0.0
    %1019 = vmatprep.subr.mxu0 0.0
    %1020 = vmatpush1.msra.mxu0 0.0
    %1021 = vmatprep.subr.mxu0 0.0
    %1022 = vmatpush1.msra.mxu0 0.0
    %1023 = vmatprep.subr.mxu0 0.0
    %1024 = vmatpush1.msra.mxu0 0.0
    %1025 = vmatprep.subr.mxu0 0.0
    %1026 = vmatpush1.msra.mxu0 0.0
    %1027 = vmatprep.subr.mxu0 0.0
    %1028 = vmatpush1.msra.mxu0 0.0
    %1029 = vmatprep.subr.mxu0 0.0
    %1030 = vmatpush1.msra.mxu0 0.0
    %1031 = vmatprep.subr.mxu0 0.0
    %1032 = vmatpush1.msra.mxu0 0.0
    %1033 = vmatprep.subr.mxu0 0.0
    %1034 = vmatpush1.msra.mxu0 0.0
    %1035 = vmatprep.mubr.f32.mxu0 0.0
    %1036 = vmatmul.mubr.f32.gmra.mrb[0].mxu0 %v969
    %v1037 = vpop.f32.mrb[0].mxu0
    %v1038 = vadd.f32 %v966, %v1037
    %v1039 = vpop.f32.mrb[0].mxu0
    %1040 = vdwg.mxu0
    %1041 = vst [vmem:[#allocation13] sm:$0xff] %v1038
    %1042 = vst [vmem:[%s25] sm:$0xff] %v595
    // Predicated region
    $region122: #{vae_forward.1} parent=1 // pred_check
      _
    $region123: #{vae_forward.1} parent=1 // pred_check_branch
      %1044 = sbr.rel (0) target = $region125
    $region124: #{vae_forward.1} parent=1 // pred_region
      %s1046 = ssub.s32 128, 128
      %1047 = vsyncadd [#allocation4], %s1046
      %s1049 = sshll.u32 [#allocation13], 4
      %s1050 = int_to_ptr.vmem [resolvable:$true] %s1049
      %1052 = dma.vmem_to_hbm [thread:$0]  %s1050, 128, %s24, [#allocation4]
    $region125: #{vae_forward.1} parent=1 // pred_fallthru
      _
    // Predicated region
    $region126: #{vae_forward.1} parent=1 // pred_check
      _
    $region127: #{vae_forward.1} parent=1 // pred_check_branch
      %1054 = sbr.rel (0) target = $region129
    $region128: #{vae_forward.1} parent=1 // pred_region
      _
    $region129: #{vae_forward.1} parent=1 // pred_fallthru
      _
    // Predicated region
    $region130: #{vae_forward.1} parent=1 // pred_check
      _
    $region131: #{vae_forward.1} parent=1 // pred_check_branch
      %1056 = sbr.rel (0) target = $region133
    $region132: #{vae_forward.1} parent=1 // pred_region
      %1057 = dma.done [#allocation4], 128
    $region133: #{vae_forward.1} parent=1 // pred_fallthru
      _
    // Predicated region
    $region134: #{vae_forward.1} parent=1 // pred_check
      _
    $region135: #{vae_forward.1} parent=1 // pred_check_branch
      %1059 = sbr.rel (0) target = $region137
    $region136: #{vae_forward.1} parent=1 // pred_region
      _
    $region137: #{vae_forward.1} parent=1 // pred_fallthru
      _
    %1060 = vsyncpa [#allocation3], 1
    %1061 = vsyncpa [#allocation6], 1
    %1062 = vsyncpa [#allocation9], 1
    %1063 = vsyncpa [#allocation12], 1
    %1064 = vsyncpa [#allocation4], 1

</llo_original>
